<compile_context>
chip_gen: v5e
topology: v5e:2x2
jax: 0.10.0
libtpu: 0.0.40
codegen_flags: <defaults>
</compile_context>

<pallas_src>
import jax
import jax.numpy as jnp
from jax.experimental import pallas as pl
from jax.experimental.pallas import tpu as pltpu


def make_fused_lstm_kernel(num_layers, B, T, H):
    """Builds a kernel: refs = (x, [w_ih, w_hh, b] * L, w_fc, b_fc, out, seq_sc).

    x is time-major flat: row t*B + b == x[b, t, :].
    """

    def kernel(*refs):
        x_ref = refs[0]
        wfc_ref = refs[1 + 3 * num_layers]
        bfc_ref = refs[2 + 3 * num_layers]
        out_ref = refs[3 + 3 * num_layers]
        seq_sc = refs[4 + 3 * num_layers]          # (T*B, H) VMEM scratch

        def recurrence(gx, w_hh_ref, store_seq):
            # gx: (T*B, 4H) precomputed input projection (+ fused bias), time-major.
            h = jnp.zeros((B, H), jnp.float32)     # carried in vregs
            c = jnp.zeros((B, H), jnp.float32)
            for t in range(T):                     # small static T -> fully unrolled
                gates = gx[t * B:(t + 1) * B, :] + jnp.dot(
                    h, w_hh_ref[...], preferred_element_type=jnp.float32)
                # One full-lane sigmoid over the packed (B, 4H) gates; tanh only on g.
                sig = jax.nn.sigmoid(gates)
                i_g = sig[:, 0 * H:1 * H]
                f_g = sig[:, 1 * H:2 * H]
                g_g = jnp.tanh(gates[:, 2 * H:3 * H])
                o_g = sig[:, 3 * H:4 * H]
                c = f_g * c + i_g * g_g
                h = o_g * jnp.tanh(c)
                if store_seq:
                    seq_sc[t * B:(t + 1) * B, :] = h
            return h

        layer_in = x_ref[...]                      # (T*B, D_in)
        h_last = None
        for l in range(num_layers):
            w_ih_ref = refs[1 + 3 * l]
            w_hh_ref = refs[2 + 3 * l]
            b_ref = refs[3 + 3 * l]
            # Hoisted input projection over ALL timesteps: one MXU matmul.
            gx = jnp.dot(layer_in, w_ih_ref[...],
                         preferred_element_type=jnp.float32) + b_ref[...]
            last = (l == num_layers - 1)
            h_last = recurrence(gx, w_hh_ref, store_seq=not last)
            if not last:
                layer_in = seq_sc[...]             # next layer's input sequence

        # Fused final Linear on the last hidden state.
        out_ref[...] = jnp.dot(h_last, wfc_ref[...],
                               preferred_element_type=jnp.float32) + bfc_ref[...]

    return kernel


def lstm_forward(x, params):
    """Replicates LSTM.forward: zero (h0, c0), stacked LSTM, Linear on out[:, -1, :]."""
    B, T, D = x.shape
    H = params["lstm"][0]["w_hh_t"].shape[0]
    O = params["fc"]["w_t"].shape[1]
    num_layers = len(params["lstm"])

    # Time-major flat layout so per-step gate slices are contiguous row blocks.
    x_tm = jnp.transpose(x, (1, 0, 2)).reshape(T * B, D)

    args = [x_tm]
    for layer in params["lstm"]:
        args += [layer["w_ih_t"], layer["w_hh_t"], layer["b"]]
    args += [params["fc"]["w_t"], params["fc"]["b"]]

    kernel = make_fused_lstm_kernel(num_layers, B, T, H)
    # TODO(synk): if B/T/H scale up, add a grid over batch (tiles of B, multiples
    # of 8) with weights resident (constant index_map), dimension_semantics=
    # ("parallel",) for v7x megacore, and bf16 weights/activations (f32 cell state).
    return pl.pallas_call(
        kernel,
        out_shape=jax.ShapeDtypeStruct((B, O), jnp.float32),
        in_specs=[pl.BlockSpec(memory_space=pltpu.MemorySpace.VMEM)] * len(args),
        out_specs=pl.BlockSpec(memory_space=pltpu.MemorySpace.VMEM),
        scratch_shapes=[pltpu.VMEM((T * B, H), jnp.float32)],
    )(*args)


def init_params(key, input_size, hidden_size, output_size, num_layers):
    """Deterministic init mimicking PyTorch's uniform(-1/sqrt(H), 1/sqrt(H))."""
    H = hidden_size
    k = 1.0 / jnp.sqrt(jnp.float32(H))
    layers = []
    for layer_idx in range(num_layers):
        d_in = input_size if layer_idx == 0 else H
        key, k1, k2, k3, k4 = jax.random.split(key, 5)
        w_ih = jax.random.uniform(k1, (4 * H, d_in), jnp.float32, -k, k)
        w_hh = jax.random.uniform(k2, (4 * H, H), jnp.float32, -k, k)
        b_ih = jax.random.uniform(k3, (4 * H,), jnp.float32, -k, k)
        b_hh = jax.random.uniform(k4, (4 * H,), jnp.float32, -k, k)
        layers.append({
            "w_ih_t": w_ih.T,                       # (d_in, 4H)
            "w_hh_t": w_hh.T,                       # (H, 4H)
            "b": (b_ih + b_hh).reshape(1, 4 * H),   # (1, 4H)
        })
    key, k5, k6 = jax.random.split(key, 3)
    w_fc = jax.random.uniform(k5, (output_size, H), jnp.float32, -k, k)
    b_fc = jax.random.uniform(k6, (output_size,), jnp.float32, -k, k)
    return {
        "lstm": layers,
        "fc": {"w_t": w_fc.T, "b": b_fc.reshape(1, output_size)},
    }


def lstm_forward_ref(x, params):
    """Pure-JAX reference of the same forward, for a correctness check."""
    out = x
    H = params["lstm"][0]["w_hh_t"].shape[0]
    for layer in params["lstm"]:
        B, T, _ = out.shape
        h = jnp.zeros((B, H), jnp.float32)
        c = jnp.zeros((B, H), jnp.float32)
        ys = []
        for t in range(T):
            gates = out[:, t, :] @ layer["w_ih_t"] + h @ layer["w_hh_t"] + layer["b"]
            i = jax.nn.sigmoid(gates[:, 0 * H:1 * H])
            f = jax.nn.sigmoid(gates[:, 1 * H:2 * H])
            g = jnp.tanh(gates[:, 2 * H:3 * H])
            o = jax.nn.sigmoid(gates[:, 3 * H:4 * H])
            c = f * c + i * g
            h = o * jnp.tanh(c)
            ys.append(h)
        out = jnp.stack(ys, axis=1)
    return out[:, -1, :] @ params["fc"]["w_t"] + params["fc"]["b"]


if __name__ == "__main__":
    B, T = 2, 8
    input_size, hidden_size, output_size, num_layers = 16, 64, 8, 2

    key = jax.random.PRNGKey(0)
    key, kx = jax.random.split(key)
    x = jax.random.normal(kx, (B, T, input_size), jnp.float32)
    params = init_params(key, input_size, hidden_size, output_size, num_layers)

    out = lstm_forward(x, params)
    out = jax.block_until_ready(out)

    ref = lstm_forward_ref(x, params)
    assert out.shape == (B, output_size)
    assert jnp.allclose(out, ref, atol=1e-4, rtol=1e-4)

    print("KERNEL_OK")
</pallas_src>

<mosaic_0001>
module attributes {stable_mosaic.version = 11 : i64} {
  func.func @kernel(%arg0: memref<16x16xf32, #tpu.memory_space<vmem>>, %arg1: memref<16x256xf32, #tpu.memory_space<vmem>>, %arg2: memref<64x256xf32, #tpu.memory_space<vmem>>, %arg3: memref<1x256xf32, #tpu.memory_space<vmem>>, %arg4: memref<64x256xf32, #tpu.memory_space<vmem>>, %arg5: memref<64x256xf32, #tpu.memory_space<vmem>>, %arg6: memref<1x256xf32, #tpu.memory_space<vmem>>, %arg7: memref<64x8xf32, #tpu.memory_space<vmem>>, %arg8: memref<1x8xf32, #tpu.memory_space<vmem>>, %arg9: memref<2x8xf32, #tpu.memory_space<vmem>>, %arg10: memref<16x64xf32, #tpu.memory_space<vmem>>) attributes {dimension_semantics = [], scalar_prefetch = 0 : i64, scratch_operands = 1 : i64, tpu.core_type = #tpu.core_type<tc>} {
    %c0 = arith.constant 0 : index
    %c0_0 = arith.constant 0 : index
    %0 = vector.load %arg0[%c0, %c0_0] : memref<16x16xf32, #tpu.memory_space<vmem>>, vector<16x16xf32>
    %c0_1 = arith.constant 0 : index
    %c0_2 = arith.constant 0 : index
    %1 = vector.load %arg1[%c0_1, %c0_2] : memref<16x256xf32, #tpu.memory_space<vmem>>, vector<16x256xf32>
    %cst = arith.constant dense<0.000000e+00> : vector<16x256xf32>
    %2 = tpu.matmul %0, %1, %cst {dimension_numbers = #tpu.dot_dimension_numbers<[1], [0], [0], [1], [0, 0, 1, 1], [], []>} : vector<16x16xf32>, vector<16x256xf32>, vector<16x256xf32> -> vector<16x256xf32>
    %c0_3 = arith.constant 0 : index
    %c0_4 = arith.constant 0 : index
    %3 = vector.load %arg3[%c0_3, %c0_4] : memref<1x256xf32, #tpu.memory_space<vmem>>, vector<1x256xf32>
    %4 = vector.broadcast %3 : vector<1x256xf32> to vector<16x256xf32>
    %5 = arith.addf %2, %4 : vector<16x256xf32>
    %cst_5 = arith.constant 0.000000e+00 : f32
    %6 = vector.broadcast %cst_5 : f32 to vector<2x64xf32>
    %cst_6 = arith.constant 0.000000e+00 : f32
    %7 = vector.broadcast %cst_6 : f32 to vector<2x64xf32>
    %8 = vector.extract_strided_slice %5 {offsets = [0, 0], sizes = [2, 256], strides = [1, 1]} : vector<16x256xf32> to vector<2x256xf32>
    %c0_7 = arith.constant 0 : index
    %c0_8 = arith.constant 0 : index
    %9 = vector.load %arg2[%c0_7, %c0_8] : memref<64x256xf32, #tpu.memory_space<vmem>>, vector<64x256xf32>
    %cst_9 = arith.constant dense<0.000000e+00> : vector<2x256xf32>
    %10 = tpu.matmul %6, %9, %cst_9 {dimension_numbers = #tpu.dot_dimension_numbers<[1], [0], [0], [1], [0, 0, 1, 1], [], []>} : vector<2x64xf32>, vector<64x256xf32>, vector<2x256xf32> -> vector<2x256xf32>
    %11 = arith.addf %8, %10 : vector<2x256xf32>
    %12 = arith.negf %11 : vector<2x256xf32>
    %13 = math.exp %12 : vector<2x256xf32>
    %cst_10 = arith.constant 1.000000e+00 : f32
    %14 = vector.broadcast %cst_10 : f32 to vector<2x256xf32>
    %15 = arith.addf %14, %13 : vector<2x256xf32>
    %16 = arith.divf %14, %15 : vector<2x256xf32>
    %17 = vector.extract_strided_slice %16 {offsets = [0, 0], sizes = [2, 64], strides = [1, 1]} : vector<2x256xf32> to vector<2x64xf32>
    %18 = vector.extract_strided_slice %16 {offsets = [0, 64], sizes = [2, 64], strides = [1, 1]} : vector<2x256xf32> to vector<2x64xf32>
    %19 = vector.extract_strided_slice %11 {offsets = [0, 128], sizes = [2, 64], strides = [1, 1]} : vector<2x256xf32> to vector<2x64xf32>
    %20 = math.tanh %19 : vector<2x64xf32>
    %21 = vector.extract_strided_slice %16 {offsets = [0, 192], sizes = [2, 64], strides = [1, 1]} : vector<2x256xf32> to vector<2x64xf32>
    %22 = arith.mulf %18, %7 : vector<2x64xf32>
    %23 = arith.mulf %17, %20 : vector<2x64xf32>
    %24 = arith.addf %22, %23 : vector<2x64xf32>
    %25 = math.tanh %24 : vector<2x64xf32>
    %26 = arith.mulf %21, %25 : vector<2x64xf32>
    %c0_11 = arith.constant 0 : index
    %c0_12 = arith.constant 0 : index
    %27 = vector.load %arg10[%c0_11, %c0_12] : memref<16x64xf32, #tpu.memory_space<vmem>>, vector<2x64xf32>
    tpu.vector_store %arg10[%c0_11, %c0_12], %26 {strides = array<i32>} : memref<16x64xf32, #tpu.memory_space<vmem>>, vector<2x64xf32>,
    %28 = vector.extract_strided_slice %5 {offsets = [2, 0], sizes = [2, 256], strides = [1, 1]} : vector<16x256xf32> to vector<2x256xf32>
    %c0_13 = arith.constant 0 : index
    %c0_14 = arith.constant 0 : index
    %29 = vector.load %arg2[%c0_13, %c0_14] : memref<64x256xf32, #tpu.memory_space<vmem>>, vector<64x256xf32>
    %cst_15 = arith.constant dense<0.000000e+00> : vector<2x256xf32>
    %30 = tpu.matmul %26, %29, %cst_15 {dimension_numbers = #tpu.dot_dimension_numbers<[1], [0], [0], [1], [0, 0, 1, 1], [], []>} : vector<2x64xf32>, vector<64x256xf32>, vector<2x256xf32> -> vector<2x256xf32>
    %31 = arith.addf %28, %30 : vector<2x256xf32>
    %32 = arith.negf %31 : vector<2x256xf32>
    %33 = math.exp %32 : vector<2x256xf32>
    %cst_16 = arith.constant 1.000000e+00 : f32
    %34 = vector.broadcast %cst_16 : f32 to vector<2x256xf32>
    %35 = arith.addf %34, %33 : vector<2x256xf32>
    %36 = arith.divf %34, %35 : vector<2x256xf32>
    %37 = vector.extract_strided_slice %36 {offsets = [0, 0], sizes = [2, 64], strides = [1, 1]} : vector<2x256xf32> to vector<2x64xf32>
    %38 = vector.extract_strided_slice %36 {offsets = [0, 64], sizes = [2, 64], strides = [1, 1]} : vector<2x256xf32> to vector<2x64xf32>
    %39 = vector.extract_strided_slice %31 {offsets = [0, 128], sizes = [2, 64], strides = [1, 1]} : vector<2x256xf32> to vector<2x64xf32>
    %40 = math.tanh %39 : vector<2x64xf32>
    %41 = vector.extract_strided_slice %36 {offsets = [0, 192], sizes = [2, 64], strides = [1, 1]} : vector<2x256xf32> to vector<2x64xf32>
    %42 = arith.mulf %38, %24 : vector<2x64xf32>
    %43 = arith.mulf %37, %40 : vector<2x64xf32>
    %44 = arith.addf %42, %43 : vector<2x64xf32>
    %45 = math.tanh %44 : vector<2x64xf32>
    %46 = arith.mulf %41, %45 : vector<2x64xf32>
    %c2 = arith.constant 2 : index
    %c0_17 = arith.constant 0 : index
    %47 = vector.load %arg10[%c2, %c0_17] : memref<16x64xf32, #tpu.memory_space<vmem>>, vector<2x64xf32>
    tpu.vector_store %arg10[%c2, %c0_17], %46 {strides = array<i32>} : memref<16x64xf32, #tpu.memory_space<vmem>>, vector<2x64xf32>,
    %48 = vector.extract_strided_slice %5 {offsets = [4, 0], sizes = [2, 256], strides = [1, 1]} : vector<16x256xf32> to vector<2x256xf32>
    %c0_18 = arith.constant 0 : index
    %c0_19 = arith.constant 0 : index
    %49 = vector.load %arg2[%c0_18, %c0_19] : memref<64x256xf32, #tpu.memory_space<vmem>>, vector<64x256xf32>
    %cst_20 = arith.constant dense<0.000000e+00> : vector<2x256xf32>
    %50 = tpu.matmul %46, %49, %cst_20 {dimension_numbers = #tpu.dot_dimension_numbers<[1], [0], [0], [1], [0, 0, 1, 1], [], []>} : vector<2x64xf32>, vector<64x256xf32>, vector<2x256xf32> -> vector<2x256xf32>
    %51 = arith.addf %48, %50 : vector<2x256xf32>
    %52 = arith.negf %51 : vector<2x256xf32>
    %53 = math.exp %52 : vector<2x256xf32>
    %cst_21 = arith.constant 1.000000e+00 : f32
    %54 = vector.broadcast %cst_21 : f32 to vector<2x256xf32>
    %55 = arith.addf %54, %53 : vector<2x256xf32>
    %56 = arith.divf %54, %55 : vector<2x256xf32>
    %57 = vector.extract_strided_slice %56 {offsets = [0, 0], sizes = [2, 64], strides = [1, 1]} : vector<2x256xf32> to vector<2x64xf32>
    %58 = vector.extract_strided_slice %56 {offsets = [0, 64], sizes = [2, 64], strides = [1, 1]} : vector<2x256xf32> to vector<2x64xf32>
    %59 = vector.extract_strided_slice %51 {offsets = [0, 128], sizes = [2, 64], strides = [1, 1]} : vector<2x256xf32> to vector<2x64xf32>
    %60 = math.tanh %59 : vector<2x64xf32>
    %61 = vector.extract_strided_slice %56 {offsets = [0, 192], sizes = [2, 64], strides = [1, 1]} : vector<2x256xf32> to vector<2x64xf32>
    %62 = arith.mulf %58, %44 : vector<2x64xf32>
    %63 = arith.mulf %57, %60 : vector<2x64xf32>
    %64 = arith.addf %62, %63 : vector<2x64xf32>
    %65 = math.tanh %64 : vector<2x64xf32>
    %66 = arith.mulf %61, %65 : vector<2x64xf32>
    %c4 = arith.constant 4 : index
    %c0_22 = arith.constant 0 : index
    %67 = vector.load %arg10[%c4, %c0_22] : memref<16x64xf32, #tpu.memory_space<vmem>>, vector<2x64xf32>
    tpu.vector_store %arg10[%c4, %c0_22], %66 {strides = array<i32>} : memref<16x64xf32, #tpu.memory_space<vmem>>, vector<2x64xf32>,
    %68 = vector.extract_strided_slice %5 {offsets = [6, 0], sizes = [2, 256], strides = [1, 1]} : vector<16x256xf32> to vector<2x256xf32>
    %c0_23 = arith.constant 0 : index
    %c0_24 = arith.constant 0 : index
    %69 = vector.load %arg2[%c0_23, %c0_24] : memref<64x256xf32, #tpu.memory_space<vmem>>, vector<64x256xf32>
    %cst_25 = arith.constant dense<0.000000e+00> : vector<2x256xf32>
    %70 = tpu.matmul %66, %69, %cst_25 {dimension_numbers = #tpu.dot_dimension_numbers<[1], [0], [0], [1], [0, 0, 1, 1], [], []>} : vector<2x64xf32>, vector<64x256xf32>, vector<2x256xf32> -> vector<2x256xf32>
    %71 = arith.addf %68, %70 : vector<2x256xf32>
    %72 = arith.negf %71 : vector<2x256xf32>
    %73 = math.exp %72 : vector<2x256xf32>
    %cst_26 = arith.constant 1.000000e+00 : f32
    %74 = vector.broadcast %cst_26 : f32 to vector<2x256xf32>
    %75 = arith.addf %74, %73 : vector<2x256xf32>
    %76 = arith.divf %74, %75 : vector<2x256xf32>
    %77 = vector.extract_strided_slice %76 {offsets = [0, 0], sizes = [2, 64], strides = [1, 1]} : vector<2x256xf32> to vector<2x64xf32>
    %78 = vector.extract_strided_slice %76 {offsets = [0, 64], sizes = [2, 64], strides = [1, 1]} : vector<2x256xf32> to vector<2x64xf32>
    %79 = vector.extract_strided_slice %71 {offsets = [0, 128], sizes = [2, 64], strides = [1, 1]} : vector<2x256xf32> to vector<2x64xf32>
    %80 = math.tanh %79 : vector<2x64xf32>
    %81 = vector.extract_strided_slice %76 {offsets = [0, 192], sizes = [2, 64], strides = [1, 1]} : vector<2x256xf32> to vector<2x64xf32>
    %82 = arith.mulf %78, %64 : vector<2x64xf32>
    %83 = arith.mulf %77, %80 : vector<2x64xf32>
    %84 = arith.addf %82, %83 : vector<2x64xf32>
    %85 = math.tanh %84 : vector<2x64xf32>
    %86 = arith.mulf %81, %85 : vector<2x64xf32>
    %c6 = arith.constant 6 : index
    %c0_27 = arith.constant 0 : index
    %87 = vector.load %arg10[%c6, %c0_27] : memref<16x64xf32, #tpu.memory_space<vmem>>, vector<2x64xf32>
    tpu.vector_store %arg10[%c6, %c0_27], %86 {strides = array<i32>} : memref<16x64xf32, #tpu.memory_space<vmem>>, vector<2x64xf32>,
    %88 = vector.extract_strided_slice %5 {offsets = [8, 0], sizes = [2, 256], strides = [1, 1]} : vector<16x256xf32> to vector<2x256xf32>
    %c0_28 = arith.constant 0 : index
    %c0_29 = arith.constant 0 : index
    %89 = vector.load %arg2[%c0_28, %c0_29] : memref<64x256xf32, #tpu.memory_space<vmem>>, vector<64x256xf32>
    %cst_30 = arith.constant dense<0.000000e+00> : vector<2x256xf32>
    %90 = tpu.matmul %86, %89, %cst_30 {dimension_numbers = #tpu.dot_dimension_numbers<[1], [0], [0], [1], [0, 0, 1, 1], [], []>} : vector<2x64xf32>, vector<64x256xf32>, vector<2x256xf32> -> vector<2x256xf32>
    %91 = arith.addf %88, %90 : vector<2x256xf32>
    %92 = arith.negf %91 : vector<2x256xf32>
    %93 = math.exp %92 : vector<2x256xf32>
    %cst_31 = arith.constant 1.000000e+00 : f32
    %94 = vector.broadcast %cst_31 : f32 to vector<2x256xf32>
    %95 = arith.addf %94, %93 : vector<2x256xf32>
    %96 = arith.divf %94, %95 : vector<2x256xf32>
    %97 = vector.extract_strided_slice %96 {offsets = [0, 0], sizes = [2, 64], strides = [1, 1]} : vector<2x256xf32> to vector<2x64xf32>
    %98 = vector.extract_strided_slice %96 {offsets = [0, 64], sizes = [2, 64], strides = [1, 1]} : vector<2x256xf32> to vector<2x64xf32>
    %99 = vector.extract_strided_slice %91 {offsets = [0, 128], sizes = [2, 64], strides = [1, 1]} : vector<2x256xf32> to vector<2x64xf32>
    %100 = math.tanh %99 : vector<2x64xf32>
    %101 = vector.extract_strided_slice %96 {offsets = [0, 192], sizes = [2, 64], strides = [1, 1]} : vector<2x256xf32> to vector<2x64xf32>
    %102 = arith.mulf %98, %84 : vector<2x64xf32>
    %103 = arith.mulf %97, %100 : vector<2x64xf32>
    %104 = arith.addf %102, %103 : vector<2x64xf32>
    %105 = math.tanh %104 : vector<2x64xf32>
    %106 = arith.mulf %101, %105 : vector<2x64xf32>
    %c8 = arith.constant 8 : index
    %c0_32 = arith.constant 0 : index
    %107 = vector.load %arg10[%c8, %c0_32] : memref<16x64xf32, #tpu.memory_space<vmem>>, vector<2x64xf32>
    tpu.vector_store %arg10[%c8, %c0_32], %106 {strides = array<i32>} : memref<16x64xf32, #tpu.memory_space<vmem>>, vector<2x64xf32>,
    %108 = vector.extract_strided_slice %5 {offsets = [10, 0], sizes = [2, 256], strides = [1, 1]} : vector<16x256xf32> to vector<2x256xf32>
    %c0_33 = arith.constant 0 : index
    %c0_34 = arith.constant 0 : index
    %109 = vector.load %arg2[%c0_33, %c0_34] : memref<64x256xf32, #tpu.memory_space<vmem>>, vector<64x256xf32>
    %cst_35 = arith.constant dense<0.000000e+00> : vector<2x256xf32>
    %110 = tpu.matmul %106, %109, %cst_35 {dimension_numbers = #tpu.dot_dimension_numbers<[1], [0], [0], [1], [0, 0, 1, 1], [], []>} : vector<2x64xf32>, vector<64x256xf32>, vector<2x256xf32> -> vector<2x256xf32>
    %111 = arith.addf %108, %110 : vector<2x256xf32>
    %112 = arith.negf %111 : vector<2x256xf32>
    %113 = math.exp %112 : vector<2x256xf32>
    %cst_36 = arith.constant 1.000000e+00 : f32
    %114 = vector.broadcast %cst_36 : f32 to vector<2x256xf32>
    %115 = arith.addf %114, %113 : vector<2x256xf32>
    %116 = arith.divf %114, %115 : vector<2x256xf32>
    %117 = vector.extract_strided_slice %116 {offsets = [0, 0], sizes = [2, 64], strides = [1, 1]} : vector<2x256xf32> to vector<2x64xf32>
    %118 = vector.extract_strided_slice %116 {offsets = [0, 64], sizes = [2, 64], strides = [1, 1]} : vector<2x256xf32> to vector<2x64xf32>
    %119 = vector.extract_strided_slice %111 {offsets = [0, 128], sizes = [2, 64], strides = [1, 1]} : vector<2x256xf32> to vector<2x64xf32>
    %120 = math.tanh %119 : vector<2x64xf32>
    %121 = vector.extract_strided_slice %116 {offsets = [0, 192], sizes = [2, 64], strides = [1, 1]} : vector<2x256xf32> to vector<2x64xf32>
    %122 = arith.mulf %118, %104 : vector<2x64xf32>
    %123 = arith.mulf %117, %120 : vector<2x64xf32>
    %124 = arith.addf %122, %123 : vector<2x64xf32>
    %125 = math.tanh %124 : vector<2x64xf32>
    %126 = arith.mulf %121, %125 : vector<2x64xf32>
    %c10 = arith.constant 10 : index
    %c0_37 = arith.constant 0 : index
    %127 = vector.load %arg10[%c10, %c0_37] : memref<16x64xf32, #tpu.memory_space<vmem>>, vector<2x64xf32>
    tpu.vector_store %arg10[%c10, %c0_37], %126 {strides = array<i32>} : memref<16x64xf32, #tpu.memory_space<vmem>>, vector<2x64xf32>,
    %128 = vector.extract_strided_slice %5 {offsets = [12, 0], sizes = [2, 256], strides = [1, 1]} : vector<16x256xf32> to vector<2x256xf32>
    %c0_38 = arith.constant 0 : index
    %c0_39 = arith.constant 0 : index
    %129 = vector.load %arg2[%c0_38, %c0_39] : memref<64x256xf32, #tpu.memory_space<vmem>>, vector<64x256xf32>
    %cst_40 = arith.constant dense<0.000000e+00> : vector<2x256xf32>
    %130 = tpu.matmul %126, %129, %cst_40 {dimension_numbers = #tpu.dot_dimension_numbers<[1], [0], [0], [1], [0, 0, 1, 1], [], []>} : vector<2x64xf32>, vector<64x256xf32>, vector<2x256xf32> -> vector<2x256xf32>
    %131 = arith.addf %128, %130 : vector<2x256xf32>
    %132 = arith.negf %131 : vector<2x256xf32>
    %133 = math.exp %132 : vector<2x256xf32>
    %cst_41 = arith.constant 1.000000e+00 : f32
    %134 = vector.broadcast %cst_41 : f32 to vector<2x256xf32>
    %135 = arith.addf %134, %133 : vector<2x256xf32>
    %136 = arith.divf %134, %135 : vector<2x256xf32>
    %137 = vector.extract_strided_slice %136 {offsets = [0, 0], sizes = [2, 64], strides = [1, 1]} : vector<2x256xf32> to vector<2x64xf32>
    %138 = vector.extract_strided_slice %136 {offsets = [0, 64], sizes = [2, 64], strides = [1, 1]} : vector<2x256xf32> to vector<2x64xf32>
    %139 = vector.extract_strided_slice %131 {offsets = [0, 128], sizes = [2, 64], strides = [1, 1]} : vector<2x256xf32> to vector<2x64xf32>
    %140 = math.tanh %139 : vector<2x64xf32>
    %141 = vector.extract_strided_slice %136 {offsets = [0, 192], sizes = [2, 64], strides = [1, 1]} : vector<2x256xf32> to vector<2x64xf32>
    %142 = arith.mulf %138, %124 : vector<2x64xf32>
    %143 = arith.mulf %137, %140 : vector<2x64xf32>
    %144 = arith.addf %142, %143 : vector<2x64xf32>
    %145 = math.tanh %144 : vector<2x64xf32>
    %146 = arith.mulf %141, %145 : vector<2x64xf32>
    %c12 = arith.constant 12 : index
    %c0_42 = arith.constant 0 : index
    %147 = vector.load %arg10[%c12, %c0_42] : memref<16x64xf32, #tpu.memory_space<vmem>>, vector<2x64xf32>
    tpu.vector_store %arg10[%c12, %c0_42], %146 {strides = array<i32>} : memref<16x64xf32, #tpu.memory_space<vmem>>, vector<2x64xf32>,
    %148 = vector.extract_strided_slice %5 {offsets = [14, 0], sizes = [2, 256], strides = [1, 1]} : vector<16x256xf32> to vector<2x256xf32>
    %c0_43 = arith.constant 0 : index
    %c0_44 = arith.constant 0 : index
    %149 = vector.load %arg2[%c0_43, %c0_44] : memref<64x256xf32, #tpu.memory_space<vmem>>, vector<64x256xf32>
    %cst_45 = arith.constant dense<0.000000e+00> : vector<2x256xf32>
    %150 = tpu.matmul %146, %149, %cst_45 {dimension_numbers = #tpu.dot_dimension_numbers<[1], [0], [0], [1], [0, 0, 1, 1], [], []>} : vector<2x64xf32>, vector<64x256xf32>, vector<2x256xf32> -> vector<2x256xf32>
    %151 = arith.addf %148, %150 : vector<2x256xf32>
    %152 = arith.negf %151 : vector<2x256xf32>
    %153 = math.exp %152 : vector<2x256xf32>
    %cst_46 = arith.constant 1.000000e+00 : f32
    %154 = vector.broadcast %cst_46 : f32 to vector<2x256xf32>
    %155 = arith.addf %154, %153 : vector<2x256xf32>
    %156 = arith.divf %154, %155 : vector<2x256xf32>
    %157 = vector.extract_strided_slice %156 {offsets = [0, 0], sizes = [2, 64], strides = [1, 1]} : vector<2x256xf32> to vector<2x64xf32>
    %158 = vector.extract_strided_slice %156 {offsets = [0, 64], sizes = [2, 64], strides = [1, 1]} : vector<2x256xf32> to vector<2x64xf32>
    %159 = vector.extract_strided_slice %151 {offsets = [0, 128], sizes = [2, 64], strides = [1, 1]} : vector<2x256xf32> to vector<2x64xf32>
    %160 = math.tanh %159 : vector<2x64xf32>
    %161 = vector.extract_strided_slice %156 {offsets = [0, 192], sizes = [2, 64], strides = [1, 1]} : vector<2x256xf32> to vector<2x64xf32>
    %162 = arith.mulf %158, %144 : vector<2x64xf32>
    %163 = arith.mulf %157, %160 : vector<2x64xf32>
    %164 = arith.addf %162, %163 : vector<2x64xf32>
    %165 = math.tanh %164 : vector<2x64xf32>
    %166 = arith.mulf %161, %165 : vector<2x64xf32>
    %c14 = arith.constant 14 : index
    %c0_47 = arith.constant 0 : index
    %167 = vector.load %arg10[%c14, %c0_47] : memref<16x64xf32, #tpu.memory_space<vmem>>, vector<2x64xf32>
    tpu.vector_store %arg10[%c14, %c0_47], %166 {strides = array<i32>} : memref<16x64xf32, #tpu.memory_space<vmem>>, vector<2x64xf32>,
    %c0_48 = arith.constant 0 : index
    %c0_49 = arith.constant 0 : index
    %168 = vector.load %arg10[%c0_48, %c0_49] : memref<16x64xf32, #tpu.memory_space<vmem>>, vector<16x64xf32>
    %c0_50 = arith.constant 0 : index
    %c0_51 = arith.constant 0 : index
    %169 = vector.load %arg4[%c0_50, %c0_51] : memref<64x256xf32, #tpu.memory_space<vmem>>, vector<64x256xf32>
    %cst_52 = arith.constant dense<0.000000e+00> : vector<16x256xf32>
    %170 = tpu.matmul %168, %169, %cst_52 {dimension_numbers = #tpu.dot_dimension_numbers<[1], [0], [0], [1], [0, 0, 1, 1], [], []>} : vector<16x64xf32>, vector<64x256xf32>, vector<16x256xf32> -> vector<16x256xf32>
    %c0_53 = arith.constant 0 : index
    %c0_54 = arith.constant 0 : index
    %171 = vector.load %arg6[%c0_53, %c0_54] : memref<1x256xf32, #tpu.memory_space<vmem>>, vector<1x256xf32>
    %172 = vector.broadcast %171 : vector<1x256xf32> to vector<16x256xf32>
    %173 = arith.addf %170, %172 : vector<16x256xf32>
    %cst_55 = arith.constant 0.000000e+00 : f32
    %174 = vector.broadcast %cst_55 : f32 to vector<2x64xf32>
    %cst_56 = arith.constant 0.000000e+00 : f32
    %175 = vector.broadcast %cst_56 : f32 to vector<2x64xf32>
    %176 = vector.extract_strided_slice %173 {offsets = [0, 0], sizes = [2, 256], strides = [1, 1]} : vector<16x256xf32> to vector<2x256xf32>
    %c0_57 = arith.constant 0 : index
    %c0_58 = arith.constant 0 : index
    %177 = vector.load %arg5[%c0_57, %c0_58] : memref<64x256xf32, #tpu.memory_space<vmem>>, vector<64x256xf32>
    %cst_59 = arith.constant dense<0.000000e+00> : vector<2x256xf32>
    %178 = tpu.matmul %174, %177, %cst_59 {dimension_numbers = #tpu.dot_dimension_numbers<[1], [0], [0], [1], [0, 0, 1, 1], [], []>} : vector<2x64xf32>, vector<64x256xf32>, vector<2x256xf32> -> vector<2x256xf32>
    %179 = arith.addf %176, %178 : vector<2x256xf32>
    %180 = arith.negf %179 : vector<2x256xf32>
    %181 = math.exp %180 : vector<2x256xf32>
    %cst_60 = arith.constant 1.000000e+00 : f32
    %182 = vector.broadcast %cst_60 : f32 to vector<2x256xf32>
    %183 = arith.addf %182, %181 : vector<2x256xf32>
    %184 = arith.divf %182, %183 : vector<2x256xf32>
    %185 = vector.extract_strided_slice %184 {offsets = [0, 0], sizes = [2, 64], strides = [1, 1]} : vector<2x256xf32> to vector<2x64xf32>
    %186 = vector.extract_strided_slice %184 {offsets = [0, 64], sizes = [2, 64], strides = [1, 1]} : vector<2x256xf32> to vector<2x64xf32>
    %187 = vector.extract_strided_slice %179 {offsets = [0, 128], sizes = [2, 64], strides = [1, 1]} : vector<2x256xf32> to vector<2x64xf32>
    %188 = math.tanh %187 : vector<2x64xf32>
    %189 = vector.extract_strided_slice %184 {offsets = [0, 192], sizes = [2, 64], strides = [1, 1]} : vector<2x256xf32> to vector<2x64xf32>
    %190 = arith.mulf %186, %175 : vector<2x64xf32>
    %191 = arith.mulf %185, %188 : vector<2x64xf32>
    %192 = arith.addf %190, %191 : vector<2x64xf32>
    %193 = math.tanh %192 : vector<2x64xf32>
    %194 = arith.mulf %189, %193 : vector<2x64xf32>
    %195 = vector.extract_strided_slice %173 {offsets = [2, 0], sizes = [2, 256], strides = [1, 1]} : vector<16x256xf32> to vector<2x256xf32>
    %c0_61 = arith.constant 0 : index
    %c0_62 = arith.constant 0 : index
    %196 = vector.load %arg5[%c0_61, %c0_62] : memref<64x256xf32, #tpu.memory_space<vmem>>, vector<64x256xf32>
    %cst_63 = arith.constant dense<0.000000e+00> : vector<2x256xf32>
    %197 = tpu.matmul %194, %196, %cst_63 {dimension_numbers = #tpu.dot_dimension_numbers<[1], [0], [0], [1], [0, 0, 1, 1], [], []>} : vector<2x64xf32>, vector<64x256xf32>, vector<2x256xf32> -> vector<2x256xf32>
    %198 = arith.addf %195, %197 : vector<2x256xf32>
    %199 = arith.negf %198 : vector<2x256xf32>
    %200 = math.exp %199 : vector<2x256xf32>
    %cst_64 = arith.constant 1.000000e+00 : f32
    %201 = vector.broadcast %cst_64 : f32 to vector<2x256xf32>
    %202 = arith.addf %201, %200 : vector<2x256xf32>
    %203 = arith.divf %201, %202 : vector<2x256xf32>
    %204 = vector.extract_strided_slice %203 {offsets = [0, 0], sizes = [2, 64], strides = [1, 1]} : vector<2x256xf32> to vector<2x64xf32>
    %205 = vector.extract_strided_slice %203 {offsets = [0, 64], sizes = [2, 64], strides = [1, 1]} : vector<2x256xf32> to vector<2x64xf32>
    %206 = vector.extract_strided_slice %198 {offsets = [0, 128], sizes = [2, 64], strides = [1, 1]} : vector<2x256xf32> to vector<2x64xf32>
    %207 = math.tanh %206 : vector<2x64xf32>
    %208 = vector.extract_strided_slice %203 {offsets = [0, 192], sizes = [2, 64], strides = [1, 1]} : vector<2x256xf32> to vector<2x64xf32>
    %209 = arith.mulf %205, %192 : vector<2x64xf32>
    %210 = arith.mulf %204, %207 : vector<2x64xf32>
    %211 = arith.addf %209, %210 : vector<2x64xf32>
    %212 = math.tanh %211 : vector<2x64xf32>
    %213 = arith.mulf %208, %212 : vector<2x64xf32>
    %214 = vector.extract_strided_slice %173 {offsets = [4, 0], sizes = [2, 256], strides = [1, 1]} : vector<16x256xf32> to vector<2x256xf32>
    %c0_65 = arith.constant 0 : index
    %c0_66 = arith.constant 0 : index
    %215 = vector.load %arg5[%c0_65, %c0_66] : memref<64x256xf32, #tpu.memory_space<vmem>>, vector<64x256xf32>
    %cst_67 = arith.constant dense<0.000000e+00> : vector<2x256xf32>
    %216 = tpu.matmul %213, %215, %cst_67 {dimension_numbers = #tpu.dot_dimension_numbers<[1], [0], [0], [1], [0, 0, 1, 1], [], []>} : vector<2x64xf32>, vector<64x256xf32>, vector<2x256xf32> -> vector<2x256xf32>
    %217 = arith.addf %214, %216 : vector<2x256xf32>
    %218 = arith.negf %217 : vector<2x256xf32>
    %219 = math.exp %218 : vector<2x256xf32>
    %cst_68 = arith.constant 1.000000e+00 : f32
    %220 = vector.broadcast %cst_68 : f32 to vector<2x256xf32>
    %221 = arith.addf %220, %219 : vector<2x256xf32>
    %222 = arith.divf %220, %221 : vector<2x256xf32>
    %223 = vector.extract_strided_slice %222 {offsets = [0, 0], sizes = [2, 64], strides = [1, 1]} : vector<2x256xf32> to vector<2x64xf32>
    %224 = vector.extract_strided_slice %222 {offsets = [0, 64], sizes = [2, 64], strides = [1, 1]} : vector<2x256xf32> to vector<2x64xf32>
    %225 = vector.extract_strided_slice %217 {offsets = [0, 128], sizes = [2, 64], strides = [1, 1]} : vector<2x256xf32> to vector<2x64xf32>
    %226 = math.tanh %225 : vector<2x64xf32>
    %227 = vector.extract_strided_slice %222 {offsets = [0, 192], sizes = [2, 64], strides = [1, 1]} : vector<2x256xf32> to vector<2x64xf32>
    %228 = arith.mulf %224, %211 : vector<2x64xf32>
    %229 = arith.mulf %223, %226 : vector<2x64xf32>
    %230 = arith.addf %228, %229 : vector<2x64xf32>
    %231 = math.tanh %230 : vector<2x64xf32>
    %232 = arith.mulf %227, %231 : vector<2x64xf32>
    %233 = vector.extract_strided_slice %173 {offsets = [6, 0], sizes = [2, 256], strides = [1, 1]} : vector<16x256xf32> to vector<2x256xf32>
    %c0_69 = arith.constant 0 : index
    %c0_70 = arith.constant 0 : index
    %234 = vector.load %arg5[%c0_69, %c0_70] : memref<64x256xf32, #tpu.memory_space<vmem>>, vector<64x256xf32>
    %cst_71 = arith.constant dense<0.000000e+00> : vector<2x256xf32>
    %235 = tpu.matmul %232, %234, %cst_71 {dimension_numbers = #tpu.dot_dimension_numbers<[1], [0], [0], [1], [0, 0, 1, 1], [], []>} : vector<2x64xf32>, vector<64x256xf32>, vector<2x256xf32> -> vector<2x256xf32>
    %236 = arith.addf %233, %235 : vector<2x256xf32>
    %237 = arith.negf %236 : vector<2x256xf32>
    %238 = math.exp %237 : vector<2x256xf32>
    %cst_72 = arith.constant 1.000000e+00 : f32
    %239 = vector.broadcast %cst_72 : f32 to vector<2x256xf32>
    %240 = arith.addf %239, %238 : vector<2x256xf32>
    %241 = arith.divf %239, %240 : vector<2x256xf32>
    %242 = vector.extract_strided_slice %241 {offsets = [0, 0], sizes = [2, 64], strides = [1, 1]} : vector<2x256xf32> to vector<2x64xf32>
    %243 = vector.extract_strided_slice %241 {offsets = [0, 64], sizes = [2, 64], strides = [1, 1]} : vector<2x256xf32> to vector<2x64xf32>
    %244 = vector.extract_strided_slice %236 {offsets = [0, 128], sizes = [2, 64], strides = [1, 1]} : vector<2x256xf32> to vector<2x64xf32>
    %245 = math.tanh %244 : vector<2x64xf32>
    %246 = vector.extract_strided_slice %241 {offsets = [0, 192], sizes = [2, 64], strides = [1, 1]} : vector<2x256xf32> to vector<2x64xf32>
    %247 = arith.mulf %243, %230 : vector<2x64xf32>
    %248 = arith.mulf %242, %245 : vector<2x64xf32>
    %249 = arith.addf %247, %248 : vector<2x64xf32>
    %250 = math.tanh %249 : vector<2x64xf32>
    %251 = arith.mulf %246, %250 : vector<2x64xf32>
    %252 = vector.extract_strided_slice %173 {offsets = [8, 0], sizes = [2, 256], strides = [1, 1]} : vector<16x256xf32> to vector<2x256xf32>
    %c0_73 = arith.constant 0 : index
    %c0_74 = arith.constant 0 : index
    %253 = vector.load %arg5[%c0_73, %c0_74] : memref<64x256xf32, #tpu.memory_space<vmem>>, vector<64x256xf32>
    %cst_75 = arith.constant dense<0.000000e+00> : vector<2x256xf32>
    %254 = tpu.matmul %251, %253, %cst_75 {dimension_numbers = #tpu.dot_dimension_numbers<[1], [0], [0], [1], [0, 0, 1, 1], [], []>} : vector<2x64xf32>, vector<64x256xf32>, vector<2x256xf32> -> vector<2x256xf32>
    %255 = arith.addf %252, %254 : vector<2x256xf32>
    %256 = arith.negf %255 : vector<2x256xf32>
    %257 = math.exp %256 : vector<2x256xf32>
    %cst_76 = arith.constant 1.000000e+00 : f32
    %258 = vector.broadcast %cst_76 : f32 to vector<2x256xf32>
    %259 = arith.addf %258, %257 : vector<2x256xf32>
    %260 = arith.divf %258, %259 : vector<2x256xf32>
    %261 = vector.extract_strided_slice %260 {offsets = [0, 0], sizes = [2, 64], strides = [1, 1]} : vector<2x256xf32> to vector<2x64xf32>
    %262 = vector.extract_strided_slice %260 {offsets = [0, 64], sizes = [2, 64], strides = [1, 1]} : vector<2x256xf32> to vector<2x64xf32>
    %263 = vector.extract_strided_slice %255 {offsets = [0, 128], sizes = [2, 64], strides = [1, 1]} : vector<2x256xf32> to vector<2x64xf32>
    %264 = math.tanh %263 : vector<2x64xf32>
    %265 = vector.extract_strided_slice %260 {offsets = [0, 192], sizes = [2, 64], strides = [1, 1]} : vector<2x256xf32> to vector<2x64xf32>
    %266 = arith.mulf %262, %249 : vector<2x64xf32>
    %267 = arith.mulf %261, %264 : vector<2x64xf32>
    %268 = arith.addf %266, %267 : vector<2x64xf32>
    %269 = math.tanh %268 : vector<2x64xf32>
    %270 = arith.mulf %265, %269 : vector<2x64xf32>
    %271 = vector.extract_strided_slice %173 {offsets = [10, 0], sizes = [2, 256], strides = [1, 1]} : vector<16x256xf32> to vector<2x256xf32>
    %c0_77 = arith.constant 0 : index
    %c0_78 = arith.constant 0 : index
    %272 = vector.load %arg5[%c0_77, %c0_78] : memref<64x256xf32, #tpu.memory_space<vmem>>, vector<64x256xf32>
    %cst_79 = arith.constant dense<0.000000e+00> : vector<2x256xf32>
    %273 = tpu.matmul %270, %272, %cst_79 {dimension_numbers = #tpu.dot_dimension_numbers<[1], [0], [0], [1], [0, 0, 1, 1], [], []>} : vector<2x64xf32>, vector<64x256xf32>, vector<2x256xf32> -> vector<2x256xf32>
    %274 = arith.addf %271, %273 : vector<2x256xf32>
    %275 = arith.negf %274 : vector<2x256xf32>
    %276 = math.exp %275 : vector<2x256xf32>
    %cst_80 = arith.constant 1.000000e+00 : f32
    %277 = vector.broadcast %cst_80 : f32 to vector<2x256xf32>
    %278 = arith.addf %277, %276 : vector<2x256xf32>
    %279 = arith.divf %277, %278 : vector<2x256xf32>
    %280 = vector.extract_strided_slice %279 {offsets = [0, 0], sizes = [2, 64], strides = [1, 1]} : vector<2x256xf32> to vector<2x64xf32>
    %281 = vector.extract_strided_slice %279 {offsets = [0, 64], sizes = [2, 64], strides = [1, 1]} : vector<2x256xf32> to vector<2x64xf32>
    %282 = vector.extract_strided_slice %274 {offsets = [0, 128], sizes = [2, 64], strides = [1, 1]} : vector<2x256xf32> to vector<2x64xf32>
    %283 = math.tanh %282 : vector<2x64xf32>
    %284 = vector.extract_strided_slice %279 {offsets = [0, 192], sizes = [2, 64], strides = [1, 1]} : vector<2x256xf32> to vector<2x64xf32>
    %285 = arith.mulf %281, %268 : vector<2x64xf32>
    %286 = arith.mulf %280, %283 : vector<2x64xf32>
    %287 = arith.addf %285, %286 : vector<2x64xf32>
    %288 = math.tanh %287 : vector<2x64xf32>
    %289 = arith.mulf %284, %288 : vector<2x64xf32>
    %290 = vector.extract_strided_slice %173 {offsets = [12, 0], sizes = [2, 256], strides = [1, 1]} : vector<16x256xf32> to vector<2x256xf32>
    %c0_81 = arith.constant 0 : index
    %c0_82 = arith.constant 0 : index
    %291 = vector.load %arg5[%c0_81, %c0_82] : memref<64x256xf32, #tpu.memory_space<vmem>>, vector<64x256xf32>
    %cst_83 = arith.constant dense<0.000000e+00> : vector<2x256xf32>
    %292 = tpu.matmul %289, %291, %cst_83 {dimension_numbers = #tpu.dot_dimension_numbers<[1], [0], [0], [1], [0, 0, 1, 1], [], []>} : vector<2x64xf32>, vector<64x256xf32>, vector<2x256xf32> -> vector<2x256xf32>
    %293 = arith.addf %290, %292 : vector<2x256xf32>
    %294 = arith.negf %293 : vector<2x256xf32>
    %295 = math.exp %294 : vector<2x256xf32>
    %cst_84 = arith.constant 1.000000e+00 : f32
    %296 = vector.broadcast %cst_84 : f32 to vector<2x256xf32>
    %297 = arith.addf %296, %295 : vector<2x256xf32>
    %298 = arith.divf %296, %297 : vector<2x256xf32>
    %299 = vector.extract_strided_slice %298 {offsets = [0, 0], sizes = [2, 64], strides = [1, 1]} : vector<2x256xf32> to vector<2x64xf32>
    %300 = vector.extract_strided_slice %298 {offsets = [0, 64], sizes = [2, 64], strides = [1, 1]} : vector<2x256xf32> to vector<2x64xf32>
    %301 = vector.extract_strided_slice %293 {offsets = [0, 128], sizes = [2, 64], strides = [1, 1]} : vector<2x256xf32> to vector<2x64xf32>
    %302 = math.tanh %301 : vector<2x64xf32>
    %303 = vector.extract_strided_slice %298 {offsets = [0, 192], sizes = [2, 64], strides = [1, 1]} : vector<2x256xf32> to vector<2x64xf32>
    %304 = arith.mulf %300, %287 : vector<2x64xf32>
    %305 = arith.mulf %299, %302 : vector<2x64xf32>
    %306 = arith.addf %304, %305 : vector<2x64xf32>
    %307 = math.tanh %306 : vector<2x64xf32>
    %308 = arith.mulf %303, %307 : vector<2x64xf32>
    %309 = vector.extract_strided_slice %173 {offsets = [14, 0], sizes = [2, 256], strides = [1, 1]} : vector<16x256xf32> to vector<2x256xf32>
    %c0_85 = arith.constant 0 : index
    %c0_86 = arith.constant 0 : index
    %310 = vector.load %arg5[%c0_85, %c0_86] : memref<64x256xf32, #tpu.memory_space<vmem>>, vector<64x256xf32>
    %cst_87 = arith.constant dense<0.000000e+00> : vector<2x256xf32>
    %311 = tpu.matmul %308, %310, %cst_87 {dimension_numbers = #tpu.dot_dimension_numbers<[1], [0], [0], [1], [0, 0, 1, 1], [], []>} : vector<2x64xf32>, vector<64x256xf32>, vector<2x256xf32> -> vector<2x256xf32>
    %312 = arith.addf %309, %311 : vector<2x256xf32>
    %313 = arith.negf %312 : vector<2x256xf32>
    %314 = math.exp %313 : vector<2x256xf32>
    %cst_88 = arith.constant 1.000000e+00 : f32
    %315 = vector.broadcast %cst_88 : f32 to vector<2x256xf32>
    %316 = arith.addf %315, %314 : vector<2x256xf32>
    %317 = arith.divf %315, %316 : vector<2x256xf32>
    %318 = vector.extract_strided_slice %317 {offsets = [0, 0], sizes = [2, 64], strides = [1, 1]} : vector<2x256xf32> to vector<2x64xf32>
    %319 = vector.extract_strided_slice %317 {offsets = [0, 64], sizes = [2, 64], strides = [1, 1]} : vector<2x256xf32> to vector<2x64xf32>
    %320 = vector.extract_strided_slice %312 {offsets = [0, 128], sizes = [2, 64], strides = [1, 1]} : vector<2x256xf32> to vector<2x64xf32>
    %321 = math.tanh %320 : vector<2x64xf32>
    %322 = vector.extract_strided_slice %317 {offsets = [0, 192], sizes = [2, 64], strides = [1, 1]} : vector<2x256xf32> to vector<2x64xf32>
    %323 = arith.mulf %319, %306 : vector<2x64xf32>
    %324 = arith.mulf %318, %321 : vector<2x64xf32>
    %325 = arith.addf %323, %324 : vector<2x64xf32>
    %326 = math.tanh %325 : vector<2x64xf32>
    %327 = arith.mulf %322, %326 : vector<2x64xf32>
    %c0_89 = arith.constant 0 : index
    %c0_90 = arith.constant 0 : index
    %328 = vector.load %arg7[%c0_89, %c0_90] : memref<64x8xf32, #tpu.memory_space<vmem>>, vector<64x8xf32>
    %cst_91 = arith.constant dense<0.000000e+00> : vector<2x8xf32>
    %329 = tpu.matmul %327, %328, %cst_91 {dimension_numbers = #tpu.dot_dimension_numbers<[1], [0], [0], [1], [0, 0, 1, 1], [], []>} : vector<2x64xf32>, vector<64x8xf32>, vector<2x8xf32> -> vector<2x8xf32>
    %c0_92 = arith.constant 0 : index
    %c0_93 = arith.constant 0 : index
    %330 = vector.load %arg8[%c0_92, %c0_93] : memref<1x8xf32, #tpu.memory_space<vmem>>, vector<1x8xf32>
    %331 = vector.broadcast %330 : vector<1x8xf32> to vector<2x8xf32>
    %332 = arith.addf %329, %331 : vector<2x8xf32>
    %c0_94 = arith.constant 0 : index
    %c0_95 = arith.constant 0 : index
    %333 = vector.load %arg9[%c0_94, %c0_95] : memref<2x8xf32, #tpu.memory_space<vmem>>, vector<2x8xf32>
    tpu.vector_store %arg9[%c0_94, %c0_95], %332 {strides = array<i32>} : memref<2x8xf32, #tpu.memory_space<vmem>>, vector<2x8xf32>,
    return
  }
}

</mosaic_0001>

<llo_original>
// kernel: tpu_custom_call.1
$region0: #{tpu_custom_call.1}
  #allocation0 [shape = 'u32[]', space=smem, size = 0x4, offset = 0x4, fixed_abs, tag = 'smem constant byte address 0x4 - core index']
  #allocation1 [shape = 'u32[72,128]{1,0:T(1,128)}', space=vmem, size = 0x9000, scoped, tag = 'internal scratch']
  #allocation2 [shape = 'f32[16,64]{1,0:T(8,128)}', space=vmem, size = 0x2000, scoped, tag = 'scratch operand']
  %s0 = inlined_call_operand.vmem [shape: f32[16,16], index: 0, kind: input, shape index: {}]
  %s1 = inlined_call_operand.vmem [shape: f32[16,256], index: 1, kind: input, shape index: {}]
  %s2 = inlined_call_operand.hbm [shape: f32[64,256], index: 2, kind: input, shape index: {}]
  %s3 = inlined_call_operand.vmem [shape: f32[1,256], index: 3, kind: input, shape index: {}]
  %s4 = inlined_call_operand.hbm [shape: f32[64,256], index: 4, kind: input, shape index: {}]
  %s5 = inlined_call_operand.hbm [shape: f32[64,256], index: 5, kind: input, shape index: {}]
  %s6 = inlined_call_operand.vmem [shape: f32[1,256], index: 6, kind: input, shape index: {}]
  %s7 = inlined_call_operand.vmem [shape: f32[64,8], index: 7, kind: input, shape index: {}]
  %s8 = inlined_call_operand.vmem [shape: f32[1,8], index: 8, kind: input, shape index: {}]
  %s9 = inlined_call_operand.hbm [shape: f32[2,8], index: 9, kind: output, shape index: {}]
  %s10 = sld [smem:[#allocation0]]
  $region58: #{tpu_custom_call.1} parent=0
    _
  %s12 = ssub.s32 1, %s10
  %s13 = scalar_select 0, %s12, %s10
  $region1: #{tpu_custom_call.1} parent=0
    #allocation3 [shape = 'u8[65536]{0}', space=vmem, size = 0x10000, scoped, tag = 'input window, operand 2, single buffered']
    #allocation4 [shape = 's32[1]{0}', space=sflag, size = 0x4, scoped, tag = 'scoped memory for tpu_custom_call.1']
    #allocation5 [shape = 's32[1]{0}', space=sflag, size = 0x4, scoped, tag = 'scoped memory for tpu_custom_call.1']
    #allocation6 [shape = 'u8[65536]{0}', space=vmem, size = 0x10000, scoped, tag = 'input window, operand 4, single buffered']
    #allocation7 [shape = 's32[1]{0}', space=sflag, size = 0x4, scoped, tag = 'scoped memory for tpu_custom_call.1']
    #allocation8 [shape = 'u8[65536]{0}', space=vmem, size = 0x10000, scoped, tag = 'input window, operand 5, single buffered']
    #allocation9 [shape = 'u8[1024]{0}', space=vmem, size = 0x400, scoped, tag = 'output window, operand 0, single buffered']
    %14 = vsyncpa [#allocation4], 0
    %15 = vsyncpa [#allocation7], 0
    %16 = vsyncpa [#allocation5], 0
    // Predicated region
    $region2: #{tpu_custom_call.1} parent=1 // pred_check
      _
    $region3: #{tpu_custom_call.1} parent=1 // pred_check_branch
      %18 = sbr.rel (0) target = $region5
    $region4: #{tpu_custom_call.1} parent=1 // pred_region
      _
    $region5: #{tpu_custom_call.1} parent=1 // pred_fallthru
      _
    // Predicated region
    $region6: #{tpu_custom_call.1} parent=1 // pred_check
      _
    $region7: #{tpu_custom_call.1} parent=1 // pred_check_branch
      %20 = sbr.rel (0) target = $region9
    $region8: #{tpu_custom_call.1} parent=1 // pred_region
      _
    $region9: #{tpu_custom_call.1} parent=1 // pred_fallthru
      _
    // Predicated region
    $region10: #{tpu_custom_call.1} parent=1 // pred_check
      _
    $region11: #{tpu_custom_call.1} parent=1 // pred_check_branch
      %22 = sbr.rel (0) target = $region13
    $region12: #{tpu_custom_call.1} parent=1 // pred_region
      %24 = vsyncadd [#allocation4], 0
      %s25 = sshll.u32 %s2, 4
      %s26 = int_to_ptr.hbm [resolvable:$true] %s25
      %s27 = sshll.u32 [#allocation3], 4
      %s28 = int_to_ptr.vmem [resolvable:$true] %s27
      %33 = dma.hbm_to_vmem [thread:$0]  %s26, 2048, %s28, [#allocation4], 256, 256, 16
    $region13: #{tpu_custom_call.1} parent=1 // pred_fallthru
      _
    // Predicated region
    $region14: #{tpu_custom_call.1} parent=1 // pred_check
      _
    $region15: #{tpu_custom_call.1} parent=1 // pred_check_branch
      %35 = sbr.rel (0) target = $region17
    $region16: #{tpu_custom_call.1} parent=1 // pred_region
      _
    $region17: #{tpu_custom_call.1} parent=1 // pred_fallthru
      _
    // Predicated region
    $region18: #{tpu_custom_call.1} parent=1 // pred_check
      _
    $region19: #{tpu_custom_call.1} parent=1 // pred_check_branch
      %37 = sbr.rel (0) target = $region21
    $region20: #{tpu_custom_call.1} parent=1 // pred_region
      %39 = vsyncadd [#allocation7], 0
      %s40 = sshll.u32 %s4, 4
      %s41 = int_to_ptr.hbm [resolvable:$true] %s40
      %s42 = sshll.u32 [#allocation6], 4
      %s43 = int_to_ptr.vmem [resolvable:$true] %s42
      %48 = dma.hbm_to_vmem [thread:$0]  %s41, 2048, %s43, [#allocation7], 256, 256, 16
    $region21: #{tpu_custom_call.1} parent=1 // pred_fallthru
      _
    // Predicated region
    $region22: #{tpu_custom_call.1} parent=1 // pred_check
      _
    $region23: #{tpu_custom_call.1} parent=1 // pred_check_branch
      %50 = sbr.rel (0) target = $region25
    $region24: #{tpu_custom_call.1} parent=1 // pred_region
      %52 = vsyncadd [#allocation7], 0
      %s53 = sshll.u32 %s5, 4
      %s54 = int_to_ptr.hbm [resolvable:$true] %s53
      %s55 = sshll.u32 [#allocation8], 4
      %s56 = int_to_ptr.vmem [resolvable:$true] %s55
      %61 = dma.hbm_to_vmem [thread:$0]  %s54, 2048, %s56, [#allocation7], 256, 256, 16
    $region25: #{tpu_custom_call.1} parent=1 // pred_fallthru
      _
    // Predicated region
    $region26: #{tpu_custom_call.1} parent=1 // pred_check
      _
    $region27: #{tpu_custom_call.1} parent=1 // pred_check_branch
      %63 = sbr.rel (0) target = $region29
    $region28: #{tpu_custom_call.1} parent=1 // pred_region
      _
    $region29: #{tpu_custom_call.1} parent=1 // pred_fallthru
      _
    // Predicated region
    $region30: #{tpu_custom_call.1} parent=1 // pred_check
      _
    $region31: #{tpu_custom_call.1} parent=1 // pred_check_branch
      %65 = sbr.rel (0) target = $region33
    $region32: #{tpu_custom_call.1} parent=1 // pred_region
      _
    $region33: #{tpu_custom_call.1} parent=1 // pred_fallthru
      _
    // Predicated region
    $region34: #{tpu_custom_call.1} parent=1 // pred_check
      _
    $region35: #{tpu_custom_call.1} parent=1 // pred_check_branch
      %67 = sbr.rel (0) target = $region37
    $region36: #{tpu_custom_call.1} parent=1 // pred_region
      _
    $region37: #{tpu_custom_call.1} parent=1 // pred_fallthru
      _
    // Predicated region
    $region38: #{tpu_custom_call.1} parent=1 // pred_check
      _
    $region39: #{tpu_custom_call.1} parent=1 // pred_check_branch
      %69 = sbr.rel (0) target = $region41
    $region40: #{tpu_custom_call.1} parent=1 // pred_region
      %71 = dma.done [#allocation4], 2048
    $region41: #{tpu_custom_call.1} parent=1 // pred_fallthru
      _
    // Predicated region
    $region42: #{tpu_custom_call.1} parent=1 // pred_check
      _
    $region43: #{tpu_custom_call.1} parent=1 // pred_check_branch
      %73 = sbr.rel (0) target = $region45
    $region44: #{tpu_custom_call.1} parent=1 // pred_region
      %75 = dma.done [#allocation7], 2048
    $region45: #{tpu_custom_call.1} parent=1 // pred_fallthru
      _
    // Predicated region
    $region46: #{tpu_custom_call.1} parent=1 // pred_check
      _
    $region47: #{tpu_custom_call.1} parent=1 // pred_check_branch
      %77 = sbr.rel (0) target = $region49
    $region48: #{tpu_custom_call.1} parent=1 // pred_region
      %79 = dma.done [#allocation7], 2048
    $region49: #{tpu_custom_call.1} parent=1 // pred_fallthru
      _
    %v80 = vld [vmem:[%s0] sm:$0xff]
    %v81 = vld [vmem:[%s0 + $0x8] sm:$0xff]
    %v82 = vld [vmem:[%s1] sm:$0xff]
    %v83 = vld [vmem:[%s1 + $0x8] sm:$0xff]
    %v84 = vld [vmem:[%s1 + $0x10] sm:$0xff]
    %v85 = vld [vmem:[%s1 + $0x18] sm:$0xff]
    %v86 = vld [vmem:[%s3] sm:$0x3]
    %v88 = vperm.slane %v86, 0
    %v89 = vperm.slane %v86, 1
    %vm92 = vcmask 130048
    %v94 = vsel %vm92, %v80, 0
    %v97 = vsel %vm92, %v81, 0
    %99 = vmatpush.msra.mxu0 0.0
    %100 = vmatpush.msra.mxu0 0.0
    %101 = vmatpush.msra.mxu0 0.0
    %102 = vmatpush.msra.mxu0 0.0
    %103 = vmatpush.msra.mxu0 0.0
    %104 = vmatpush.msra.mxu0 0.0
    %105 = vmatpush.msra.mxu0 0.0
    %106 = vmatpush.msra.mxu0 0.0
    %107 = vmatpush.msra.mxu0 0.0
    %108 = vmatpush.msra.mxu0 0.0
    %109 = vmatpush.msra.mxu0 0.0
    %110 = vmatpush.msra.mxu0 0.0
    %111 = vmatpush.msra.mxu0 0.0
    %112 = vmatpush.msra.mxu0 0.0
    %113 = vmatpush.msra.mxu0 %v84
    %114 = vmatpush.msra.mxu0 %v82
    %115 = vmatmul.f32.gmra.mxu0 %v94
    %v116 = vpop.f32.mrf.mxu0
    %v117 = vadd.f32 %v88, %v116
    %118 = vmatmul.f32.gmra.mxu0 %v97
    %v119 = vpop.f32.mrf.mxu0
    %v120 = vadd.f32 %v88, %v119
    %121 = vdwg.mxu0
    %122 = vmatpush.msra.mxu0 0.0
    %123 = vmatpush.msra.mxu0 0.0
    %124 = vmatpush.msra.mxu0 0.0
    %125 = vmatpush.msra.mxu0 0.0
    %126 = vmatpush.msra.mxu0 0.0
    %127 = vmatpush.msra.mxu0 0.0
    %128 = vmatpush.msra.mxu0 0.0
    %129 = vmatpush.msra.mxu0 0.0
    %130 = vmatpush.msra.mxu0 0.0
    %131 = vmatpush.msra.mxu0 0.0
    %132 = vmatpush.msra.mxu0 0.0
    %133 = vmatpush.msra.mxu0 0.0
    %134 = vmatpush.msra.mxu0 0.0
    %135 = vmatpush.msra.mxu0 0.0
    %136 = vmatpush.msra.mxu0 %v85
    %137 = vmatpush.msra.mxu0 %v83
    %138 = vmatmul.f32.gmra.mxu0 %v94
    %v139 = vpop.f32.mrf.mxu0
    %v140 = vadd.f32 %v89, %v139
    %141 = vmatmul.f32.gmra.mxu0 %v97
    %v142 = vpop.f32.mrf.mxu0
    %v143 = vadd.f32 %v89, %v142
    %144 = vdwg.mxu0
    %v145 = vld [vmem:[#allocation3] sm:$0xff]
    %v146 = vld [vmem:[#allocation3 + $0x8] sm:$0xff]
    %v147 = vld [vmem:[#allocation3 + $0x10] sm:$0xff]
    %v148 = vld [vmem:[#allocation3 + $0x18] sm:$0xff]
    %v149 = vld [vmem:[#allocation3 + $0x20] sm:$0xff]
    %v150 = vld [vmem:[#allocation3 + $0x28] sm:$0xff]
    %v151 = vld [vmem:[#allocation3 + $0x30] sm:$0xff]
    %v152 = vld [vmem:[#allocation3 + $0x38] sm:$0xff]
    %v153 = vld [vmem:[#allocation3 + $0x40] sm:$0xff]
    %v154 = vld [vmem:[#allocation3 + $0x48] sm:$0xff]
    %v155 = vld [vmem:[#allocation3 + $0x50] sm:$0xff]
    %v156 = vld [vmem:[#allocation3 + $0x58] sm:$0xff]
    %v157 = vld [vmem:[#allocation3 + $0x60] sm:$0xff]
    %v158 = vld [vmem:[#allocation3 + $0x68] sm:$0xff]
    %v159 = vld [vmem:[#allocation3 + $0x70] sm:$0xff]
    %v160 = vld [vmem:[#allocation3 + $0x78] sm:$0xff]
    %vm161 = vcmask 523264
    %v163 = vsel %vm161, 0.0, 0
    %165 = vmatpush.msra.mxu0 0.0
    %166 = vmatpush.msra.mxu0 0.0
    %167 = vmatpush.msra.mxu0 0.0
    %168 = vmatpush.msra.mxu0 0.0
    %169 = vmatpush.msra.mxu0 0.0
    %170 = vmatpush.msra.mxu0 0.0
    %171 = vmatpush.msra.mxu0 0.0
    %172 = vmatpush.msra.mxu0 0.0
    %173 = vmatpush.msra.mxu0 %v159
    %174 = vmatpush.msra.mxu0 %v157
    %175 = vmatpush.msra.mxu0 %v155
    %176 = vmatpush.msra.mxu0 %v153
    %177 = vmatpush.msra.mxu0 %v151
    %178 = vmatpush.msra.mxu0 %v149
    %179 = vmatpush.msra.mxu0 %v147
    %180 = vmatpush.msra.mxu0 %v145
    %181 = vmatmul.f32.gmra.mxu0 %v163
    %v182 = vpop.f32.mrf.mxu0
    %v183 = vadd.f32 0.0, %v182
    %184 = vdwg.mxu0
    %185 = vmatpush.msra.mxu0 0.0
    %186 = vmatpush.msra.mxu0 0.0
    %187 = vmatpush.msra.mxu0 0.0
    %188 = vmatpush.msra.mxu0 0.0
    %189 = vmatpush.msra.mxu0 0.0
    %190 = vmatpush.msra.mxu0 0.0
    %191 = vmatpush.msra.mxu0 0.0
    %192 = vmatpush.msra.mxu0 0.0
    %193 = vmatpush.msra.mxu0 %v160
    %194 = vmatpush.msra.mxu0 %v158
    %195 = vmatpush.msra.mxu0 %v156
    %196 = vmatpush.msra.mxu0 %v154
    %197 = vmatpush.msra.mxu0 %v152
    %198 = vmatpush.msra.mxu0 %v150
    %199 = vmatpush.msra.mxu0 %v148
    %200 = vmatpush.msra.mxu0 %v146
    %201 = vmatmul.f32.gmra.mxu0 %v163
    %v202 = vpop.f32.mrf.mxu0
    %v203 = vadd.f32 0.0, %v202
    %204 = vdwg.mxu0
    %v205 = vadd.f32 %v117, %v183
    %v206 = vadd.f32 %v140, %v203
    %v207 = vxor.u32 %v205, 2147483648
    %v208 = vxor.u32 %v206, 2147483648
    %v209 = vmul.f32 %v207, 1.442695
    %v210 = vpow.pop %v209
    %v211 = vmul.f32 %v208, 1.442695
    %v212 = vpow.pop %v211
    %v213 = vadd.f32 %v210, 1.0
    %v214 = vadd.f32 %v212, 1.0
    %v215 = vrcp.pop %v213
    %v216 = vmul.f32 %v213, %v215
    %v217 = vsub.f32 1.0, %v216
    %v218 = vmul.f32 %v215, %v217
    %v219 = vadd.f32 %v215, %v218
    %vm220 = vweird.f32 %v213
    %vm221 = vweird.f32 %v215
    %vm222 = vmor %vm220, %vm221
    %v223 = vsel %vm222, %v215, %v219
    %v224 = vand.u32 2147483647, %v213
    %vm225 = vcmp.eq.f32.partialorder %v224, 8.507059e+37
    %v226 = vand.u32 %v213, 2147483648
    %v227 = vor.u32 1.1754944e-38, %v226
    %v228 = vsel %vm225, %v227, %v223
    %v229 = vmul.f32 1.0, %v228
    %v230 = vrcp.pop %v214
    %v231 = vmul.f32 %v214, %v230
    %v232 = vsub.f32 1.0, %v231
    %v233 = vmul.f32 %v230, %v232
    %v234 = vadd.f32 %v230, %v233
    %vm235 = vweird.f32 %v214
    %vm236 = vweird.f32 %v230
    %vm237 = vmor %vm235, %vm236
    %v238 = vsel %vm237, %v230, %v234
    %v239 = vand.u32 2147483647, %v214
    %vm240 = vcmp.eq.f32.partialorder %v239, 8.507059e+37
    %v241 = vand.u32 %v214, 2147483648
    %v242 = vor.u32 1.1754944e-38, %v241
    %v243 = vsel %vm240, %v242, %v238
    %v244 = vmul.f32 1.0, %v243
    %v245 = vtanh.pop %v206
    %v246 = vmul.f32 %v229, 0.0
    %v247 = vmul.f32 %v229, %v245
    %249 = vrot.lane.b32.xlu0 %v247, 64
    %v250 = vpop.permute.xlu0 %249
    %v252 = vadd.f32 %v246, %v250
    %v253 = vtanh.pop %v252
    %v254 = vmul.f32 %v244, %v253
    %256 = vrot.lane.b32.xlu0 %v254, 64
    %v257 = vpop.permute.xlu0 %256
    %vm259 = vcmask 517120
    %260 = vst.msk [vmem:[#allocation2] sm:$0x3] %vm259, %v257
    %v261 = vld [vmem:[#allocation3] sm:$0xff]
    %v262 = vld [vmem:[#allocation3 + $0x8] sm:$0xff]
    %v263 = vld [vmem:[#allocation3 + $0x10] sm:$0xff]
    %v264 = vld [vmem:[#allocation3 + $0x18] sm:$0xff]
    %v265 = vld [vmem:[#allocation3 + $0x20] sm:$0xff]
    %v266 = vld [vmem:[#allocation3 + $0x28] sm:$0xff]
    %v267 = vld [vmem:[#allocation3 + $0x30] sm:$0xff]
    %v268 = vld [vmem:[#allocation3 + $0x38] sm:$0xff]
    %v269 = vld [vmem:[#allocation3 + $0x40] sm:$0xff]
    %v270 = vld [vmem:[#allocation3 + $0x48] sm:$0xff]
    %v271 = vld [vmem:[#allocation3 + $0x50] sm:$0xff]
    %v272 = vld [vmem:[#allocation3 + $0x58] sm:$0xff]
    %v273 = vld [vmem:[#allocation3 + $0x60] sm:$0xff]
    %v274 = vld [vmem:[#allocation3 + $0x68] sm:$0xff]
    %v275 = vld [vmem:[#allocation3 + $0x70] sm:$0xff]
    %v276 = vld [vmem:[#allocation3 + $0x78] sm:$0xff]
    %v277 = vsel %vm161, %v257, 0
    %279 = vmatpush.msra.mxu0 0.0
    %280 = vmatpush.msra.mxu0 0.0
    %281 = vmatpush.msra.mxu0 0.0
    %282 = vmatpush.msra.mxu0 0.0
    %283 = vmatpush.msra.mxu0 0.0
    %284 = vmatpush.msra.mxu0 0.0
    %285 = vmatpush.msra.mxu0 0.0
    %286 = vmatpush.msra.mxu0 0.0
    %287 = vmatpush.msra.mxu0 %v275
    %288 = vmatpush.msra.mxu0 %v273
    %289 = vmatpush.msra.mxu0 %v271
    %290 = vmatpush.msra.mxu0 %v269
    %291 = vmatpush.msra.mxu0 %v267
    %292 = vmatpush.msra.mxu0 %v265
    %293 = vmatpush.msra.mxu0 %v263
    %294 = vmatpush.msra.mxu0 %v261
    %295 = vmatmul.f32.gmra.mxu0 %v277
    %v296 = vpop.f32.mrf.mxu0
    %v297 = vadd.f32 0.0, %v296
    %298 = vdwg.mxu0
    %299 = vmatpush.msra.mxu0 0.0
    %300 = vmatpush.msra.mxu0 0.0
    %301 = vmatpush.msra.mxu0 0.0
    %302 = vmatpush.msra.mxu0 0.0
    %303 = vmatpush.msra.mxu0 0.0
    %304 = vmatpush.msra.mxu0 0.0
    %305 = vmatpush.msra.mxu0 0.0
    %306 = vmatpush.msra.mxu0 0.0
    %307 = vmatpush.msra.mxu0 %v276
    %308 = vmatpush.msra.mxu0 %v274
    %309 = vmatpush.msra.mxu0 %v272
    %310 = vmatpush.msra.mxu0 %v270
    %311 = vmatpush.msra.mxu0 %v268
    %312 = vmatpush.msra.mxu0 %v266
    %313 = vmatpush.msra.mxu0 %v264
    %314 = vmatpush.msra.mxu0 %v262
    %315 = vmatmul.f32.gmra.mxu0 %v277
    %v316 = vpop.f32.mrf.mxu0
    %v317 = vadd.f32 0.0, %v316
    %318 = vdwg.mxu0
    %v321 = vrot.slane %v297, 6
    %v322 = vrot.slane %v317, 6
    %v325 = vadd.f32 %v117, %v321
    %v326 = vadd.f32 %v140, %v322
    %v327 = vxor.u32 %v325, 2147483648
    %v328 = vxor.u32 %v326, 2147483648
    %v329 = vmul.f32 %v327, 1.442695
    %v330 = vpow.pop %v329
    %v331 = vmul.f32 %v328, 1.442695
    %v332 = vpow.pop %v331
    %v333 = vadd.f32 %v330, 1.0
    %v334 = vadd.f32 %v332, 1.0
    %v335 = vrcp.pop %v333
    %v336 = vmul.f32 %v333, %v335
    %v337 = vsub.f32 1.0, %v336
    %v338 = vmul.f32 %v335, %v337
    %v339 = vadd.f32 %v335, %v338
    %vm340 = vweird.f32 %v333
    %vm341 = vweird.f32 %v335
    %vm342 = vmor %vm340, %vm341
    %v343 = vsel %vm342, %v335, %v339
    %v344 = vand.u32 2147483647, %v333
    %vm345 = vcmp.eq.f32.partialorder %v344, 8.507059e+37
    %v346 = vand.u32 %v333, 2147483648
    %v347 = vor.u32 1.1754944e-38, %v346
    %v348 = vsel %vm345, %v347, %v343
    %v349 = vmul.f32 1.0, %v348
    %v350 = vrcp.pop %v334
    %v351 = vmul.f32 %v334, %v350
    %v352 = vsub.f32 1.0, %v351
    %v353 = vmul.f32 %v350, %v352
    %v354 = vadd.f32 %v350, %v353
    %vm355 = vweird.f32 %v334
    %vm356 = vweird.f32 %v350
    %vm357 = vmor %vm355, %vm356
    %v358 = vsel %vm357, %v350, %v354
    %v359 = vand.u32 2147483647, %v334
    %vm360 = vcmp.eq.f32.partialorder %v359, 8.507059e+37
    %v361 = vand.u32 %v334, 2147483648
    %v362 = vor.u32 1.1754944e-38, %v361
    %v363 = vsel %vm360, %v362, %v358
    %v364 = vmul.f32 1.0, %v363
    %v365 = vtanh.pop %v326
    %v367 = vrot.slane %v252, 6
    %v369 = vmul.f32 %v349, %v367
    %v370 = vmul.f32 %v349, %v365
    %372 = vrot.lane.b32.xlu0 %v370, 64
    %v373 = vpop.permute.xlu0 %372
    %v375 = vadd.f32 %v369, %v373
    %v376 = vtanh.pop %v375
    %v377 = vmul.f32 %v364, %v376
    %379 = vrot.lane.b32.xlu0 %v377, 64
    %v380 = vpop.permute.xlu0 %379
    %vm382 = vcmask 519170
    %383 = vst.msk [vmem:[#allocation2] sm:$0xc] %vm382, %v380
    %v384 = vld [vmem:[#allocation3] sm:$0xff]
    %v385 = vld [vmem:[#allocation3 + $0x8] sm:$0xff]
    %v386 = vld [vmem:[#allocation3 + $0x10] sm:$0xff]
    %v387 = vld [vmem:[#allocation3 + $0x18] sm:$0xff]
    %v388 = vld [vmem:[#allocation3 + $0x20] sm:$0xff]
    %v389 = vld [vmem:[#allocation3 + $0x28] sm:$0xff]
    %v390 = vld [vmem:[#allocation3 + $0x30] sm:$0xff]
    %v391 = vld [vmem:[#allocation3 + $0x38] sm:$0xff]
    %v392 = vld [vmem:[#allocation3 + $0x40] sm:$0xff]
    %v393 = vld [vmem:[#allocation3 + $0x48] sm:$0xff]
    %v394 = vld [vmem:[#allocation3 + $0x50] sm:$0xff]
    %v395 = vld [vmem:[#allocation3 + $0x58] sm:$0xff]
    %v396 = vld [vmem:[#allocation3 + $0x60] sm:$0xff]
    %v397 = vld [vmem:[#allocation3 + $0x68] sm:$0xff]
    %v398 = vld [vmem:[#allocation3 + $0x70] sm:$0xff]
    %v399 = vld [vmem:[#allocation3 + $0x78] sm:$0xff]
    %v400 = vrot.slane %v377, 2
    %401 = vrot.lane.b32.xlu0 %v400, 64
    %v402 = vpop.permute.xlu0 %401
    %v403 = vsel %vm161, %v402, 0
    %405 = vmatpush.msra.mxu0 0.0
    %406 = vmatpush.msra.mxu0 0.0
    %407 = vmatpush.msra.mxu0 0.0
    %408 = vmatpush.msra.mxu0 0.0
    %409 = vmatpush.msra.mxu0 0.0
    %410 = vmatpush.msra.mxu0 0.0
    %411 = vmatpush.msra.mxu0 0.0
    %412 = vmatpush.msra.mxu0 0.0
    %413 = vmatpush.msra.mxu0 %v398
    %414 = vmatpush.msra.mxu0 %v396
    %415 = vmatpush.msra.mxu0 %v394
    %416 = vmatpush.msra.mxu0 %v392
    %417 = vmatpush.msra.mxu0 %v390
    %418 = vmatpush.msra.mxu0 %v388
    %419 = vmatpush.msra.mxu0 %v386
    %420 = vmatpush.msra.mxu0 %v384
    %421 = vmatmul.f32.gmra.mxu0 %v403
    %v422 = vpop.f32.mrf.mxu0
    %v423 = vadd.f32 0.0, %v422
    %424 = vdwg.mxu0
    %425 = vmatpush.msra.mxu0 0.0
    %426 = vmatpush.msra.mxu0 0.0
    %427 = vmatpush.msra.mxu0 0.0
    %428 = vmatpush.msra.mxu0 0.0
    %429 = vmatpush.msra.mxu0 0.0
    %430 = vmatpush.msra.mxu0 0.0
    %431 = vmatpush.msra.mxu0 0.0
    %432 = vmatpush.msra.mxu0 0.0
    %433 = vmatpush.msra.mxu0 %v399
    %434 = vmatpush.msra.mxu0 %v397
    %435 = vmatpush.msra.mxu0 %v395
    %436 = vmatpush.msra.mxu0 %v393
    %437 = vmatpush.msra.mxu0 %v391
    %438 = vmatpush.msra.mxu0 %v389
    %439 = vmatpush.msra.mxu0 %v387
    %440 = vmatpush.msra.mxu0 %v385
    %441 = vmatmul.f32.gmra.mxu0 %v403
    %v442 = vpop.f32.mrf.mxu0
    %v443 = vadd.f32 0.0, %v442
    %444 = vdwg.mxu0
    %v447 = vrot.slane %v423, 4
    %v448 = vrot.slane %v443, 4
    %v451 = vadd.f32 %v117, %v447
    %v452 = vadd.f32 %v140, %v448
    %v453 = vxor.u32 %v451, 2147483648
    %v454 = vxor.u32 %v452, 2147483648
    %v455 = vmul.f32 %v453, 1.442695
    %v456 = vpow.pop %v455
    %v457 = vmul.f32 %v454, 1.442695
    %v458 = vpow.pop %v457
    %v459 = vadd.f32 %v456, 1.0
    %v460 = vadd.f32 %v458, 1.0
    %v461 = vrcp.pop %v459
    %v462 = vmul.f32 %v459, %v461
    %v463 = vsub.f32 1.0, %v462
    %v464 = vmul.f32 %v461, %v463
    %v465 = vadd.f32 %v461, %v464
    %vm466 = vweird.f32 %v459
    %vm467 = vweird.f32 %v461
    %vm468 = vmor %vm466, %vm467
    %v469 = vsel %vm468, %v461, %v465
    %v470 = vand.u32 2147483647, %v459
    %vm471 = vcmp.eq.f32.partialorder %v470, 8.507059e+37
    %v472 = vand.u32 %v459, 2147483648
    %v473 = vor.u32 1.1754944e-38, %v472
    %v474 = vsel %vm471, %v473, %v469
    %v475 = vmul.f32 1.0, %v474
    %v476 = vrcp.pop %v460
    %v477 = vmul.f32 %v460, %v476
    %v478 = vsub.f32 1.0, %v477
    %v479 = vmul.f32 %v476, %v478
    %v480 = vadd.f32 %v476, %v479
    %vm481 = vweird.f32 %v460
    %vm482 = vweird.f32 %v476
    %vm483 = vmor %vm481, %vm482
    %v484 = vsel %vm483, %v476, %v480
    %v485 = vand.u32 2147483647, %v460
    %vm486 = vcmp.eq.f32.partialorder %v485, 8.507059e+37
    %v487 = vand.u32 %v460, 2147483648
    %v488 = vor.u32 1.1754944e-38, %v487
    %v489 = vsel %vm486, %v488, %v484
    %v490 = vmul.f32 1.0, %v489
    %v491 = vtanh.pop %v452
    %v493 = vrot.slane %v375, 6
    %v495 = vmul.f32 %v475, %v493
    %v496 = vmul.f32 %v475, %v491
    %498 = vrot.lane.b32.xlu0 %v496, 64
    %v499 = vpop.permute.xlu0 %498
    %v501 = vadd.f32 %v495, %v499
    %v502 = vtanh.pop %v501
    %v503 = vmul.f32 %v490, %v502
    %505 = vrot.lane.b32.xlu0 %v503, 64
    %v506 = vpop.permute.xlu0 %505
    %vm508 = vcmask 521220
    %509 = vst.msk [vmem:[#allocation2] sm:$0x30] %vm508, %v506
    %v510 = vld [vmem:[#allocation3] sm:$0xff]
    %v511 = vld [vmem:[#allocation3 + $0x8] sm:$0xff]
    %v512 = vld [vmem:[#allocation3 + $0x10] sm:$0xff]
    %v513 = vld [vmem:[#allocation3 + $0x18] sm:$0xff]
    %v514 = vld [vmem:[#allocation3 + $0x20] sm:$0xff]
    %v515 = vld [vmem:[#allocation3 + $0x28] sm:$0xff]
    %v516 = vld [vmem:[#allocation3 + $0x30] sm:$0xff]
    %v517 = vld [vmem:[#allocation3 + $0x38] sm:$0xff]
    %v518 = vld [vmem:[#allocation3 + $0x40] sm:$0xff]
    %v519 = vld [vmem:[#allocation3 + $0x48] sm:$0xff]
    %v520 = vld [vmem:[#allocation3 + $0x50] sm:$0xff]
    %v521 = vld [vmem:[#allocation3 + $0x58] sm:$0xff]
    %v522 = vld [vmem:[#allocation3 + $0x60] sm:$0xff]
    %v523 = vld [vmem:[#allocation3 + $0x68] sm:$0xff]
    %v524 = vld [vmem:[#allocation3 + $0x70] sm:$0xff]
    %v525 = vld [vmem:[#allocation3 + $0x78] sm:$0xff]
    %v526 = vrot.slane %v503, 4
    %527 = vrot.lane.b32.xlu0 %v526, 64
    %v528 = vpop.permute.xlu0 %527
    %v529 = vsel %vm161, %v528, 0
    %531 = vmatpush.msra.mxu0 0.0
    %532 = vmatpush.msra.mxu0 0.0
    %533 = vmatpush.msra.mxu0 0.0
    %534 = vmatpush.msra.mxu0 0.0
    %535 = vmatpush.msra.mxu0 0.0
    %536 = vmatpush.msra.mxu0 0.0
    %537 = vmatpush.msra.mxu0 0.0
    %538 = vmatpush.msra.mxu0 0.0
    %539 = vmatpush.msra.mxu0 %v524
    %540 = vmatpush.msra.mxu0 %v522
    %541 = vmatpush.msra.mxu0 %v520
    %542 = vmatpush.msra.mxu0 %v518
    %543 = vmatpush.msra.mxu0 %v516
    %544 = vmatpush.msra.mxu0 %v514
    %545 = vmatpush.msra.mxu0 %v512
    %546 = vmatpush.msra.mxu0 %v510
    %547 = vmatmul.f32.gmra.mxu0 %v529
    %v548 = vpop.f32.mrf.mxu0
    %v549 = vadd.f32 0.0, %v548
    %550 = vdwg.mxu0
    %551 = vmatpush.msra.mxu0 0.0
    %552 = vmatpush.msra.mxu0 0.0
    %553 = vmatpush.msra.mxu0 0.0
    %554 = vmatpush.msra.mxu0 0.0
    %555 = vmatpush.msra.mxu0 0.0
    %556 = vmatpush.msra.mxu0 0.0
    %557 = vmatpush.msra.mxu0 0.0
    %558 = vmatpush.msra.mxu0 0.0
    %559 = vmatpush.msra.mxu0 %v525
    %560 = vmatpush.msra.mxu0 %v523
    %561 = vmatpush.msra.mxu0 %v521
    %562 = vmatpush.msra.mxu0 %v519
    %563 = vmatpush.msra.mxu0 %v517
    %564 = vmatpush.msra.mxu0 %v515
    %565 = vmatpush.msra.mxu0 %v513
    %566 = vmatpush.msra.mxu0 %v511
    %567 = vmatmul.f32.gmra.mxu0 %v529
    %v568 = vpop.f32.mrf.mxu0
    %v569 = vadd.f32 0.0, %v568
    %570 = vdwg.mxu0
    %v573 = vrot.slane %v549, 2
    %v574 = vrot.slane %v569, 2
    %v577 = vadd.f32 %v117, %v573
    %v578 = vadd.f32 %v140, %v574
    %v579 = vxor.u32 %v577, 2147483648
    %v580 = vxor.u32 %v578, 2147483648
    %v581 = vmul.f32 %v579, 1.442695
    %v582 = vpow.pop %v581
    %v583 = vmul.f32 %v580, 1.442695
    %v584 = vpow.pop %v583
    %v585 = vadd.f32 %v582, 1.0
    %v586 = vadd.f32 %v584, 1.0
    %v587 = vrcp.pop %v585
    %v588 = vmul.f32 %v585, %v587
    %v589 = vsub.f32 1.0, %v588
    %v590 = vmul.f32 %v587, %v589
    %v591 = vadd.f32 %v587, %v590
    %vm592 = vweird.f32 %v585
    %vm593 = vweird.f32 %v587
    %vm594 = vmor %vm592, %vm593
    %v595 = vsel %vm594, %v587, %v591
    %v596 = vand.u32 2147483647, %v585
    %vm597 = vcmp.eq.f32.partialorder %v596, 8.507059e+37
    %v598 = vand.u32 %v585, 2147483648
    %v599 = vor.u32 1.1754944e-38, %v598
    %v600 = vsel %vm597, %v599, %v595
    %v601 = vmul.f32 1.0, %v600
    %v602 = vrcp.pop %v586
    %v603 = vmul.f32 %v586, %v602
    %v604 = vsub.f32 1.0, %v603
    %v605 = vmul.f32 %v602, %v604
    %v606 = vadd.f32 %v602, %v605
    %vm607 = vweird.f32 %v586
    %vm608 = vweird.f32 %v602
    %vm609 = vmor %vm607, %vm608
    %v610 = vsel %vm609, %v602, %v606
    %v611 = vand.u32 2147483647, %v586
    %vm612 = vcmp.eq.f32.partialorder %v611, 8.507059e+37
    %v613 = vand.u32 %v586, 2147483648
    %v614 = vor.u32 1.1754944e-38, %v613
    %v615 = vsel %vm612, %v614, %v610
    %v616 = vmul.f32 1.0, %v615
    %v617 = vtanh.pop %v578
    %v619 = vrot.slane %v501, 6
    %v621 = vmul.f32 %v601, %v619
    %v622 = vmul.f32 %v601, %v617
    %624 = vrot.lane.b32.xlu0 %v622, 64
    %v625 = vpop.permute.xlu0 %624
    %v627 = vadd.f32 %v621, %v625
    %v628 = vtanh.pop %v627
    %v629 = vmul.f32 %v616, %v628
    %631 = vrot.lane.b32.xlu0 %v629, 64
    %v632 = vpop.permute.xlu0 %631
    %vm634 = vcmask 523270
    %635 = vst.msk [vmem:[#allocation2] sm:$0xc0] %vm634, %v632
    %v636 = vld [vmem:[#allocation3] sm:$0xff]
    %v637 = vld [vmem:[#allocation3 + $0x8] sm:$0xff]
    %v638 = vld [vmem:[#allocation3 + $0x10] sm:$0xff]
    %v639 = vld [vmem:[#allocation3 + $0x18] sm:$0xff]
    %v640 = vld [vmem:[#allocation3 + $0x20] sm:$0xff]
    %v641 = vld [vmem:[#allocation3 + $0x28] sm:$0xff]
    %v642 = vld [vmem:[#allocation3 + $0x30] sm:$0xff]
    %v643 = vld [vmem:[#allocation3 + $0x38] sm:$0xff]
    %v644 = vld [vmem:[#allocation3 + $0x40] sm:$0xff]
    %v645 = vld [vmem:[#allocation3 + $0x48] sm:$0xff]
    %v646 = vld [vmem:[#allocation3 + $0x50] sm:$0xff]
    %v647 = vld [vmem:[#allocation3 + $0x58] sm:$0xff]
    %v648 = vld [vmem:[#allocation3 + $0x60] sm:$0xff]
    %v649 = vld [vmem:[#allocation3 + $0x68] sm:$0xff]
    %v650 = vld [vmem:[#allocation3 + $0x70] sm:$0xff]
    %v651 = vld [vmem:[#allocation3 + $0x78] sm:$0xff]
    %v652 = vrot.slane %v629, 6
    %653 = vrot.lane.b32.xlu0 %v652, 64
    %v654 = vpop.permute.xlu0 %653
    %v655 = vsel %vm161, %v654, 0
    %657 = vmatpush.msra.mxu0 0.0
    %658 = vmatpush.msra.mxu0 0.0
    %659 = vmatpush.msra.mxu0 0.0
    %660 = vmatpush.msra.mxu0 0.0
    %661 = vmatpush.msra.mxu0 0.0
    %662 = vmatpush.msra.mxu0 0.0
    %663 = vmatpush.msra.mxu0 0.0
    %664 = vmatpush.msra.mxu0 0.0
    %665 = vmatpush.msra.mxu0 %v650
    %666 = vmatpush.msra.mxu0 %v648
    %667 = vmatpush.msra.mxu0 %v646
    %668 = vmatpush.msra.mxu0 %v644
    %669 = vmatpush.msra.mxu0 %v642
    %670 = vmatpush.msra.mxu0 %v640
    %671 = vmatpush.msra.mxu0 %v638
    %672 = vmatpush.msra.mxu0 %v636
    %673 = vmatmul.f32.gmra.mxu0 %v655
    %v674 = vpop.f32.mrf.mxu0
    %v675 = vadd.f32 0.0, %v674
    %676 = vdwg.mxu0
    %677 = vmatpush.msra.mxu0 0.0
    %678 = vmatpush.msra.mxu0 0.0
    %679 = vmatpush.msra.mxu0 0.0
    %680 = vmatpush.msra.mxu0 0.0
    %681 = vmatpush.msra.mxu0 0.0
    %682 = vmatpush.msra.mxu0 0.0
    %683 = vmatpush.msra.mxu0 0.0
    %684 = vmatpush.msra.mxu0 0.0
    %685 = vmatpush.msra.mxu0 %v651
    %686 = vmatpush.msra.mxu0 %v649
    %687 = vmatpush.msra.mxu0 %v647
    %688 = vmatpush.msra.mxu0 %v645
    %689 = vmatpush.msra.mxu0 %v643
    %690 = vmatpush.msra.mxu0 %v641
    %691 = vmatpush.msra.mxu0 %v639
    %692 = vmatpush.msra.mxu0 %v637
    %693 = vmatmul.f32.gmra.mxu0 %v655
    %v694 = vpop.f32.mrf.mxu0
    %v695 = vadd.f32 0.0, %v694
    %696 = vdwg.mxu0
    %v697 = vadd.f32 %v120, %v675
    %v698 = vadd.f32 %v143, %v695
    %v699 = vxor.u32 %v697, 2147483648
    %v700 = vxor.u32 %v698, 2147483648
    %v701 = vmul.f32 %v699, 1.442695
    %v702 = vpow.pop %v701
    %v703 = vmul.f32 %v700, 1.442695
    %v704 = vpow.pop %v703
    %v705 = vadd.f32 %v702, 1.0
    %v706 = vadd.f32 %v704, 1.0
    %v707 = vrcp.pop %v705
    %v708 = vmul.f32 %v705, %v707
    %v709 = vsub.f32 1.0, %v708
    %v710 = vmul.f32 %v707, %v709
    %v711 = vadd.f32 %v707, %v710
    %vm712 = vweird.f32 %v705
    %vm713 = vweird.f32 %v707
    %vm714 = vmor %vm712, %vm713
    %v715 = vsel %vm714, %v707, %v711
    %v716 = vand.u32 2147483647, %v705
    %vm717 = vcmp.eq.f32.partialorder %v716, 8.507059e+37
    %v718 = vand.u32 %v705, 2147483648
    %v719 = vor.u32 1.1754944e-38, %v718
    %v720 = vsel %vm717, %v719, %v715
    %v721 = vmul.f32 1.0, %v720
    %v722 = vrcp.pop %v706
    %v723 = vmul.f32 %v706, %v722
    %v724 = vsub.f32 1.0, %v723
    %v725 = vmul.f32 %v722, %v724
    %v726 = vadd.f32 %v722, %v725
    %vm727 = vweird.f32 %v706
    %vm728 = vweird.f32 %v722
    %vm729 = vmor %vm727, %vm728
    %v730 = vsel %vm729, %v722, %v726
    %v731 = vand.u32 2147483647, %v706
    %vm732 = vcmp.eq.f32.partialorder %v731, 8.507059e+37
    %v733 = vand.u32 %v706, 2147483648
    %v734 = vor.u32 1.1754944e-38, %v733
    %v735 = vsel %vm732, %v734, %v730
    %v736 = vmul.f32 1.0, %v735
    %v737 = vtanh.pop %v698
    %v739 = vrot.slane %v627, 6
    %v741 = vmul.f32 %v721, %v739
    %v742 = vmul.f32 %v721, %v737
    %744 = vrot.lane.b32.xlu0 %v742, 64
    %v745 = vpop.permute.xlu0 %744
    %v747 = vadd.f32 %v741, %v745
    %v748 = vtanh.pop %v747
    %v749 = vmul.f32 %v736, %v748
    %751 = vrot.lane.b32.xlu0 %v749, 64
    %v752 = vpop.permute.xlu0 %751
    %754 = vst.msk [vmem:[#allocation2 + $0x8] sm:$0x3] %vm259, %v752
    %v755 = vld [vmem:[#allocation3] sm:$0xff]
    %v756 = vld [vmem:[#allocation3 + $0x8] sm:$0xff]
    %v757 = vld [vmem:[#allocation3 + $0x10] sm:$0xff]
    %v758 = vld [vmem:[#allocation3 + $0x18] sm:$0xff]
    %v759 = vld [vmem:[#allocation3 + $0x20] sm:$0xff]
    %v760 = vld [vmem:[#allocation3 + $0x28] sm:$0xff]
    %v761 = vld [vmem:[#allocation3 + $0x30] sm:$0xff]
    %v762 = vld [vmem:[#allocation3 + $0x38] sm:$0xff]
    %v763 = vld [vmem:[#allocation3 + $0x40] sm:$0xff]
    %v764 = vld [vmem:[#allocation3 + $0x48] sm:$0xff]
    %v765 = vld [vmem:[#allocation3 + $0x50] sm:$0xff]
    %v766 = vld [vmem:[#allocation3 + $0x58] sm:$0xff]
    %v767 = vld [vmem:[#allocation3 + $0x60] sm:$0xff]
    %v768 = vld [vmem:[#allocation3 + $0x68] sm:$0xff]
    %v769 = vld [vmem:[#allocation3 + $0x70] sm:$0xff]
    %v770 = vld [vmem:[#allocation3 + $0x78] sm:$0xff]
    %v771 = vsel %vm161, %v752, 0
    %773 = vmatpush.msra.mxu0 0.0
    %774 = vmatpush.msra.mxu0 0.0
    %775 = vmatpush.msra.mxu0 0.0
    %776 = vmatpush.msra.mxu0 0.0
    %777 = vmatpush.msra.mxu0 0.0
    %778 = vmatpush.msra.mxu0 0.0
    %779 = vmatpush.msra.mxu0 0.0
    %780 = vmatpush.msra.mxu0 0.0
    %781 = vmatpush.msra.mxu0 %v769
    %782 = vmatpush.msra.mxu0 %v767
    %783 = vmatpush.msra.mxu0 %v765
    %784 = vmatpush.msra.mxu0 %v763
    %785 = vmatpush.msra.mxu0 %v761
    %786 = vmatpush.msra.mxu0 %v759
    %787 = vmatpush.msra.mxu0 %v757
    %788 = vmatpush.msra.mxu0 %v755
    %789 = vmatmul.f32.gmra.mxu0 %v771
    %v790 = vpop.f32.mrf.mxu0
    %v791 = vadd.f32 0.0, %v790
    %792 = vdwg.mxu0
    %793 = vmatpush.msra.mxu0 0.0
    %794 = vmatpush.msra.mxu0 0.0
    %795 = vmatpush.msra.mxu0 0.0
    %796 = vmatpush.msra.mxu0 0.0
    %797 = vmatpush.msra.mxu0 0.0
    %798 = vmatpush.msra.mxu0 0.0
    %799 = vmatpush.msra.mxu0 0.0
    %800 = vmatpush.msra.mxu0 0.0
    %801 = vmatpush.msra.mxu0 %v770
    %802 = vmatpush.msra.mxu0 %v768
    %803 = vmatpush.msra.mxu0 %v766
    %804 = vmatpush.msra.mxu0 %v764
    %805 = vmatpush.msra.mxu0 %v762
    %806 = vmatpush.msra.mxu0 %v760
    %807 = vmatpush.msra.mxu0 %v758
    %808 = vmatpush.msra.mxu0 %v756
    %809 = vmatmul.f32.gmra.mxu0 %v771
    %v810 = vpop.f32.mrf.mxu0
    %v811 = vadd.f32 0.0, %v810
    %812 = vdwg.mxu0
    %v815 = vrot.slane %v791, 6
    %v816 = vrot.slane %v811, 6
    %v819 = vadd.f32 %v120, %v815
    %v820 = vadd.f32 %v143, %v816
    %v821 = vxor.u32 %v819, 2147483648
    %v822 = vxor.u32 %v820, 2147483648
    %v823 = vmul.f32 %v821, 1.442695
    %v824 = vpow.pop %v823
    %v825 = vmul.f32 %v822, 1.442695
    %v826 = vpow.pop %v825
    %v827 = vadd.f32 %v824, 1.0
    %v828 = vadd.f32 %v826, 1.0
    %v829 = vrcp.pop %v827
    %v830 = vmul.f32 %v827, %v829
    %v831 = vsub.f32 1.0, %v830
    %v832 = vmul.f32 %v829, %v831
    %v833 = vadd.f32 %v829, %v832
    %vm834 = vweird.f32 %v827
    %vm835 = vweird.f32 %v829
    %vm836 = vmor %vm834, %vm835
    %v837 = vsel %vm836, %v829, %v833
    %v838 = vand.u32 2147483647, %v827
    %vm839 = vcmp.eq.f32.partialorder %v838, 8.507059e+37
    %v840 = vand.u32 %v827, 2147483648
    %v841 = vor.u32 1.1754944e-38, %v840
    %v842 = vsel %vm839, %v841, %v837
    %v843 = vmul.f32 1.0, %v842
    %v844 = vrcp.pop %v828
    %v845 = vmul.f32 %v828, %v844
    %v846 = vsub.f32 1.0, %v845
    %v847 = vmul.f32 %v844, %v846
    %v848 = vadd.f32 %v844, %v847
    %vm849 = vweird.f32 %v828
    %vm850 = vweird.f32 %v844
    %vm851 = vmor %vm849, %vm850
    %v852 = vsel %vm851, %v844, %v848
    %v853 = vand.u32 2147483647, %v828
    %vm854 = vcmp.eq.f32.partialorder %v853, 8.507059e+37
    %v855 = vand.u32 %v828, 2147483648
    %v856 = vor.u32 1.1754944e-38, %v855
    %v857 = vsel %vm854, %v856, %v852
    %v858 = vmul.f32 1.0, %v857
    %v859 = vtanh.pop %v820
    %v861 = vrot.slane %v747, 6
    %v863 = vmul.f32 %v843, %v861
    %v864 = vmul.f32 %v843, %v859
    %866 = vrot.lane.b32.xlu0 %v864, 64
    %v867 = vpop.permute.xlu0 %866
    %v869 = vadd.f32 %v863, %v867
    %v870 = vtanh.pop %v869
    %v871 = vmul.f32 %v858, %v870
    %873 = vrot.lane.b32.xlu0 %v871, 64
    %v874 = vpop.permute.xlu0 %873
    %876 = vst.msk [vmem:[#allocation2 + $0x8] sm:$0xc] %vm382, %v874
    %v877 = vld [vmem:[#allocation3] sm:$0xff]
    %v878 = vld [vmem:[#allocation3 + $0x8] sm:$0xff]
    %v879 = vld [vmem:[#allocation3 + $0x10] sm:$0xff]
    %v880 = vld [vmem:[#allocation3 + $0x18] sm:$0xff]
    %v881 = vld [vmem:[#allocation3 + $0x20] sm:$0xff]
    %v882 = vld [vmem:[#allocation3 + $0x28] sm:$0xff]
    %v883 = vld [vmem:[#allocation3 + $0x30] sm:$0xff]
    %v884 = vld [vmem:[#allocation3 + $0x38] sm:$0xff]
    %v885 = vld [vmem:[#allocation3 + $0x40] sm:$0xff]
    %v886 = vld [vmem:[#allocation3 + $0x48] sm:$0xff]
    %v887 = vld [vmem:[#allocation3 + $0x50] sm:$0xff]
    %v888 = vld [vmem:[#allocation3 + $0x58] sm:$0xff]
    %v889 = vld [vmem:[#allocation3 + $0x60] sm:$0xff]
    %v890 = vld [vmem:[#allocation3 + $0x68] sm:$0xff]
    %v891 = vld [vmem:[#allocation3 + $0x70] sm:$0xff]
    %v892 = vld [vmem:[#allocation3 + $0x78] sm:$0xff]
    %v893 = vrot.slane %v871, 2
    %894 = vrot.lane.b32.xlu0 %v893, 64
    %v895 = vpop.permute.xlu0 %894
    %v896 = vsel %vm161, %v895, 0
    %898 = vmatpush.msra.mxu0 0.0
    %899 = vmatpush.msra.mxu0 0.0
    %900 = vmatpush.msra.mxu0 0.0
    %901 = vmatpush.msra.mxu0 0.0
    %902 = vmatpush.msra.mxu0 0.0
    %903 = vmatpush.msra.mxu0 0.0
    %904 = vmatpush.msra.mxu0 0.0
    %905 = vmatpush.msra.mxu0 0.0
    %906 = vmatpush.msra.mxu0 %v891
    %907 = vmatpush.msra.mxu0 %v889
    %908 = vmatpush.msra.mxu0 %v887
    %909 = vmatpush.msra.mxu0 %v885
    %910 = vmatpush.msra.mxu0 %v883
    %911 = vmatpush.msra.mxu0 %v881
    %912 = vmatpush.msra.mxu0 %v879
    %913 = vmatpush.msra.mxu0 %v877
    %914 = vmatmul.f32.gmra.mxu0 %v896
    %v915 = vpop.f32.mrf.mxu0
    %v916 = vadd.f32 0.0, %v915
    %917 = vdwg.mxu0
    %918 = vmatpush.msra.mxu0 0.0
    %919 = vmatpush.msra.mxu0 0.0
    %920 = vmatpush.msra.mxu0 0.0
    %921 = vmatpush.msra.mxu0 0.0
    %922 = vmatpush.msra.mxu0 0.0
    %923 = vmatpush.msra.mxu0 0.0
    %924 = vmatpush.msra.mxu0 0.0
    %925 = vmatpush.msra.mxu0 0.0
    %926 = vmatpush.msra.mxu0 %v892
    %927 = vmatpush.msra.mxu0 %v890
    %928 = vmatpush.msra.mxu0 %v888
    %929 = vmatpush.msra.mxu0 %v886
    %930 = vmatpush.msra.mxu0 %v884
    %931 = vmatpush.msra.mxu0 %v882
    %932 = vmatpush.msra.mxu0 %v880
    %933 = vmatpush.msra.mxu0 %v878
    %934 = vmatmul.f32.gmra.mxu0 %v896
    %v935 = vpop.f32.mrf.mxu0
    %v936 = vadd.f32 0.0, %v935
    %937 = vdwg.mxu0
    %v940 = vrot.slane %v916, 4
    %v941 = vrot.slane %v936, 4
    %v944 = vadd.f32 %v120, %v940
    %v945 = vadd.f32 %v143, %v941
    %v946 = vxor.u32 %v944, 2147483648
    %v947 = vxor.u32 %v945, 2147483648
    %v948 = vmul.f32 %v946, 1.442695
    %v949 = vpow.pop %v948
    %v950 = vmul.f32 %v947, 1.442695
    %v951 = vpow.pop %v950
    %v952 = vadd.f32 %v949, 1.0
    %v953 = vadd.f32 %v951, 1.0
    %v954 = vrcp.pop %v952
    %v955 = vmul.f32 %v952, %v954
    %v956 = vsub.f32 1.0, %v955
    %v957 = vmul.f32 %v954, %v956
    %v958 = vadd.f32 %v954, %v957
    %vm959 = vweird.f32 %v952
    %vm960 = vweird.f32 %v954
    %vm961 = vmor %vm959, %vm960
    %v962 = vsel %vm961, %v954, %v958
    %v963 = vand.u32 2147483647, %v952
    %vm964 = vcmp.eq.f32.partialorder %v963, 8.507059e+37
    %v965 = vand.u32 %v952, 2147483648
    %v966 = vor.u32 1.1754944e-38, %v965
    %v967 = vsel %vm964, %v966, %v962
    %v968 = vmul.f32 1.0, %v967
    %v969 = vrcp.pop %v953
    %v970 = vmul.f32 %v953, %v969
    %v971 = vsub.f32 1.0, %v970
    %v972 = vmul.f32 %v969, %v971
    %v973 = vadd.f32 %v969, %v972
    %vm974 = vweird.f32 %v953
    %vm975 = vweird.f32 %v969
    %vm976 = vmor %vm974, %vm975
    %v977 = vsel %vm976, %v969, %v973
    %v978 = vand.u32 2147483647, %v953
    %vm979 = vcmp.eq.f32.partialorder %v978, 8.507059e+37
    %v980 = vand.u32 %v953, 2147483648
    %v981 = vor.u32 1.1754944e-38, %v980
    %v982 = vsel %vm979, %v981, %v977
    %v983 = vmul.f32 1.0, %v982
    %v984 = vtanh.pop %v945
    %v986 = vrot.slane %v869, 6
    %v988 = vmul.f32 %v968, %v986
    %v989 = vmul.f32 %v968, %v984
    %991 = vrot.lane.b32.xlu0 %v989, 64
    %v992 = vpop.permute.xlu0 %991
    %v994 = vadd.f32 %v988, %v992
    %v995 = vtanh.pop %v994
    %v996 = vmul.f32 %v983, %v995
    %998 = vrot.lane.b32.xlu0 %v996, 64
    %v999 = vpop.permute.xlu0 %998
    %1001 = vst.msk [vmem:[#allocation2 + $0x8] sm:$0x30] %vm508, %v999
    %v1002 = vld [vmem:[#allocation3] sm:$0xff]
    %v1003 = vld [vmem:[#allocation3 + $0x8] sm:$0xff]
    %v1004 = vld [vmem:[#allocation3 + $0x10] sm:$0xff]
    %v1005 = vld [vmem:[#allocation3 + $0x18] sm:$0xff]
    %v1006 = vld [vmem:[#allocation3 + $0x20] sm:$0xff]
    %v1007 = vld [vmem:[#allocation3 + $0x28] sm:$0xff]
    %v1008 = vld [vmem:[#allocation3 + $0x30] sm:$0xff]
    %v1009 = vld [vmem:[#allocation3 + $0x38] sm:$0xff]
    %v1010 = vld [vmem:[#allocation3 + $0x40] sm:$0xff]
    %v1011 = vld [vmem:[#allocation3 + $0x48] sm:$0xff]
    %v1012 = vld [vmem:[#allocation3 + $0x50] sm:$0xff]
    %v1013 = vld [vmem:[#allocation3 + $0x58] sm:$0xff]
    %v1014 = vld [vmem:[#allocation3 + $0x60] sm:$0xff]
    %v1015 = vld [vmem:[#allocation3 + $0x68] sm:$0xff]
    %v1016 = vld [vmem:[#allocation3 + $0x70] sm:$0xff]
    %v1017 = vld [vmem:[#allocation3 + $0x78] sm:$0xff]
    %v1018 = vrot.slane %v996, 4
    %1019 = vrot.lane.b32.xlu0 %v1018, 64
    %v1020 = vpop.permute.xlu0 %1019
    %v1021 = vsel %vm161, %v1020, 0
    %1023 = vmatpush.msra.mxu0 0.0
    %1024 = vmatpush.msra.mxu0 0.0
    %1025 = vmatpush.msra.mxu0 0.0
    %1026 = vmatpush.msra.mxu0 0.0
    %1027 = vmatpush.msra.mxu0 0.0
    %1028 = vmatpush.msra.mxu0 0.0
    %1029 = vmatpush.msra.mxu0 0.0
    %1030 = vmatpush.msra.mxu0 0.0
    %1031 = vmatpush.msra.mxu0 %v1016
    %1032 = vmatpush.msra.mxu0 %v1014
    %1033 = vmatpush.msra.mxu0 %v1012
    %1034 = vmatpush.msra.mxu0 %v1010
    %1035 = vmatpush.msra.mxu0 %v1008
    %1036 = vmatpush.msra.mxu0 %v1006
    %1037 = vmatpush.msra.mxu0 %v1004
    %1038 = vmatpush.msra.mxu0 %v1002
    %1039 = vmatmul.f32.gmra.mxu0 %v1021
    %v1040 = vpop.f32.mrf.mxu0
    %v1041 = vadd.f32 0.0, %v1040
    %1042 = vdwg.mxu0
    %1043 = vmatpush.msra.mxu0 0.0
    %1044 = vmatpush.msra.mxu0 0.0
    %1045 = vmatpush.msra.mxu0 0.0
    %1046 = vmatpush.msra.mxu0 0.0
    %1047 = vmatpush.msra.mxu0 0.0
    %1048 = vmatpush.msra.mxu0 0.0
    %1049 = vmatpush.msra.mxu0 0.0
    %1050 = vmatpush.msra.mxu0 0.0
    %1051 = vmatpush.msra.mxu0 %v1017
    %1052 = vmatpush.msra.mxu0 %v1015
    %1053 = vmatpush.msra.mxu0 %v1013
    %1054 = vmatpush.msra.mxu0 %v1011
    %1055 = vmatpush.msra.mxu0 %v1009
    %1056 = vmatpush.msra.mxu0 %v1007
    %1057 = vmatpush.msra.mxu0 %v1005
    %1058 = vmatpush.msra.mxu0 %v1003
    %1059 = vmatmul.f32.gmra.mxu0 %v1021
    %v1060 = vpop.f32.mrf.mxu0
    %v1061 = vadd.f32 0.0, %v1060
    %1062 = vdwg.mxu0
    %v1065 = vrot.slane %v1041, 2
    %v1066 = vrot.slane %v1061, 2
    %v1069 = vadd.f32 %v120, %v1065
    %v1070 = vadd.f32 %v143, %v1066
    %v1071 = vxor.u32 %v1069, 2147483648
    %v1072 = vxor.u32 %v1070, 2147483648
    %v1073 = vmul.f32 %v1071, 1.442695
    %v1074 = vpow.pop %v1073
    %v1075 = vmul.f32 %v1072, 1.442695
    %v1076 = vpow.pop %v1075
    %v1077 = vadd.f32 %v1074, 1.0
    %v1078 = vadd.f32 %v1076, 1.0
    %v1079 = vrcp.pop %v1077
    %v1080 = vmul.f32 %v1077, %v1079
    %v1081 = vsub.f32 1.0, %v1080
    %v1082 = vmul.f32 %v1079, %v1081
    %v1083 = vadd.f32 %v1079, %v1082
    %vm1084 = vweird.f32 %v1077
    %vm1085 = vweird.f32 %v1079
    %vm1086 = vmor %vm1084, %vm1085
    %v1087 = vsel %vm1086, %v1079, %v1083
    %v1088 = vand.u32 2147483647, %v1077
    %vm1089 = vcmp.eq.f32.partialorder %v1088, 8.507059e+37
    %v1090 = vand.u32 %v1077, 2147483648
    %v1091 = vor.u32 1.1754944e-38, %v1090
    %v1092 = vsel %vm1089, %v1091, %v1087
    %v1093 = vmul.f32 1.0, %v1092
    %v1094 = vrcp.pop %v1078
    %v1095 = vmul.f32 %v1078, %v1094
    %v1096 = vsub.f32 1.0, %v1095
    %v1097 = vmul.f32 %v1094, %v1096
    %v1098 = vadd.f32 %v1094, %v1097
    %vm1099 = vweird.f32 %v1078
    %vm1100 = vweird.f32 %v1094
    %vm1101 = vmor %vm1099, %vm1100
    %v1102 = vsel %vm1101, %v1094, %v1098
    %v1103 = vand.u32 2147483647, %v1078
    %vm1104 = vcmp.eq.f32.partialorder %v1103, 8.507059e+37
    %v1105 = vand.u32 %v1078, 2147483648
    %v1106 = vor.u32 1.1754944e-38, %v1105
    %v1107 = vsel %vm1104, %v1106, %v1102
    %v1108 = vmul.f32 1.0, %v1107
    %v1109 = vtanh.pop %v1070
    %v1111 = vrot.slane %v994, 6
    %v1113 = vmul.f32 %v1093, %v1111
    %v1114 = vmul.f32 %v1093, %v1109
    %1116 = vrot.lane.b32.xlu0 %v1114, 64
    %v1117 = vpop.permute.xlu0 %1116
    %v1119 = vadd.f32 %v1113, %v1117
    %v1120 = vtanh.pop %v1119
    %v1121 = vmul.f32 %v1108, %v1120
    %1123 = vrot.lane.b32.xlu0 %v1121, 64
    %v1124 = vpop.permute.xlu0 %1123
    %1126 = vst.msk [vmem:[#allocation2 + $0x8] sm:$0xc0] %vm634, %v1124
    %v1127 = vld [vmem:[#allocation2] sm:$0xff]
    %v1128 = vld [vmem:[#allocation2 + $0x8] sm:$0xff]
    %v1129 = vld [vmem:[#allocation6] sm:$0xff]
    %v1130 = vld [vmem:[#allocation6 + $0x8] sm:$0xff]
    %v1131 = vld [vmem:[#allocation6 + $0x10] sm:$0xff]
    %v1132 = vld [vmem:[#allocation6 + $0x18] sm:$0xff]
    %v1133 = vld [vmem:[#allocation6 + $0x20] sm:$0xff]
    %v1134 = vld [vmem:[#allocation6 + $0x28] sm:$0xff]
    %v1135 = vld [vmem:[#allocation6 + $0x30] sm:$0xff]
    %v1136 = vld [vmem:[#allocation6 + $0x38] sm:$0xff]
    %v1137 = vld [vmem:[#allocation6 + $0x40] sm:$0xff]
    %v1138 = vld [vmem:[#allocation6 + $0x48] sm:$0xff]
    %v1139 = vld [vmem:[#allocation6 + $0x50] sm:$0xff]
    %v1140 = vld [vmem:[#allocation6 + $0x58] sm:$0xff]
    %v1141 = vld [vmem:[#allocation6 + $0x60] sm:$0xff]
    %v1142 = vld [vmem:[#allocation6 + $0x68] sm:$0xff]
    %v1143 = vld [vmem:[#allocation6 + $0x70] sm:$0xff]
    %v1144 = vld [vmem:[#allocation6 + $0x78] sm:$0xff]
    %v1145 = vld [vmem:[%s6] sm:$0x3]
    %v1147 = vperm.slane %v1145, 0
    %v1148 = vperm.slane %v1145, 1
    %v1152 = vsel %vm161, %v1127, 0
    %v1155 = vsel %vm161, %v1128, 0
    %1157 = vmatpush.msra.mxu0 0.0
    %1158 = vmatpush.msra.mxu0 0.0
    %1159 = vmatpush.msra.mxu0 0.0
    %1160 = vmatpush.msra.mxu0 0.0
    %1161 = vmatpush.msra.mxu0 0.0
    %1162 = vmatpush.msra.mxu0 0.0
    %1163 = vmatpush.msra.mxu0 0.0
    %1164 = vmatpush.msra.mxu0 0.0
    %1165 = vmatpush.msra.mxu0 %v1143
    %1166 = vmatpush.msra.mxu0 %v1141
    %1167 = vmatpush.msra.mxu0 %v1139
    %1168 = vmatpush.msra.mxu0 %v1137
    %1169 = vmatpush.msra.mxu0 %v1135
    %1170 = vmatpush.msra.mxu0 %v1133
    %1171 = vmatpush.msra.mxu0 %v1131
    %1172 = vmatpush.msra.mxu0 %v1129
    %1173 = vmatmul.f32.gmra.mxu0 %v1152
    %v1174 = vpop.f32.mrf.mxu0
    %v1175 = vadd.f32 %v1147, %v1174
    %1176 = vmatmul.f32.gmra.mxu0 %v1155
    %v1177 = vpop.f32.mrf.mxu0
    %v1178 = vadd.f32 %v1147, %v1177
    %1179 = vdwg.mxu0
    %1180 = vmatpush.msra.mxu0 0.0
    %1181 = vmatpush.msra.mxu0 0.0
    %1182 = vmatpush.msra.mxu0 0.0
    %1183 = vmatpush.msra.mxu0 0.0
    %1184 = vmatpush.msra.mxu0 0.0
    %1185 = vmatpush.msra.mxu0 0.0
    %1186 = vmatpush.msra.mxu0 0.0
    %1187 = vmatpush.msra.mxu0 0.0
    %1188 = vmatpush.msra.mxu0 %v1144
    %1189 = vmatpush.msra.mxu0 %v1142
    %1190 = vmatpush.msra.mxu0 %v1140
    %1191 = vmatpush.msra.mxu0 %v1138
    %1192 = vmatpush.msra.mxu0 %v1136
    %1193 = vmatpush.msra.mxu0 %v1134
    %1194 = vmatpush.msra.mxu0 %v1132
    %1195 = vmatpush.msra.mxu0 %v1130
    %1196 = vmatmul.f32.gmra.mxu0 %v1152
    %v1197 = vpop.f32.mrf.mxu0
    %v1198 = vadd.f32 %v1148, %v1197
    %1199 = vmatmul.f32.gmra.mxu0 %v1155
    %v1200 = vpop.f32.mrf.mxu0
    %v1201 = vadd.f32 %v1148, %v1200
    %1202 = vdwg.mxu0
    %v1203 = vld [vmem:[#allocation8] sm:$0xff]
    %v1204 = vld [vmem:[#allocation8 + $0x8] sm:$0xff]
    %v1205 = vld [vmem:[#allocation8 + $0x10] sm:$0xff]
    %v1206 = vld [vmem:[#allocation8 + $0x18] sm:$0xff]
    %v1207 = vld [vmem:[#allocation8 + $0x20] sm:$0xff]
    %v1208 = vld [vmem:[#allocation8 + $0x28] sm:$0xff]
    %v1209 = vld [vmem:[#allocation8 + $0x30] sm:$0xff]
    %v1210 = vld [vmem:[#allocation8 + $0x38] sm:$0xff]
    %v1211 = vld [vmem:[#allocation8 + $0x40] sm:$0xff]
    %v1212 = vld [vmem:[#allocation8 + $0x48] sm:$0xff]
    %v1213 = vld [vmem:[#allocation8 + $0x50] sm:$0xff]
    %v1214 = vld [vmem:[#allocation8 + $0x58] sm:$0xff]
    %v1215 = vld [vmem:[#allocation8 + $0x60] sm:$0xff]
    %v1216 = vld [vmem:[#allocation8 + $0x68] sm:$0xff]
    %v1217 = vld [vmem:[#allocation8 + $0x70] sm:$0xff]
    %v1218 = vld [vmem:[#allocation8 + $0x78] sm:$0xff]
    %1219 = vmatpush.msra.mxu0 0.0
    %1220 = vmatpush.msra.mxu0 0.0
    %1221 = vmatpush.msra.mxu0 0.0
    %1222 = vmatpush.msra.mxu0 0.0
    %1223 = vmatpush.msra.mxu0 0.0
    %1224 = vmatpush.msra.mxu0 0.0
    %1225 = vmatpush.msra.mxu0 0.0
    %1226 = vmatpush.msra.mxu0 0.0
    %1227 = vmatpush.msra.mxu0 %v1217
    %1228 = vmatpush.msra.mxu0 %v1215
    %1229 = vmatpush.msra.mxu0 %v1213
    %1230 = vmatpush.msra.mxu0 %v1211
    %1231 = vmatpush.msra.mxu0 %v1209
    %1232 = vmatpush.msra.mxu0 %v1207
    %1233 = vmatpush.msra.mxu0 %v1205
    %1234 = vmatpush.msra.mxu0 %v1203
    %1235 = vmatmul.f32.gmra.mxu0 %v163
    %v1236 = vpop.f32.mrf.mxu0
    %v1237 = vadd.f32 0.0, %v1236
    %1238 = vdwg.mxu0
    %1239 = vmatpush.msra.mxu0 0.0
    %1240 = vmatpush.msra.mxu0 0.0
    %1241 = vmatpush.msra.mxu0 0.0
    %1242 = vmatpush.msra.mxu0 0.0
    %1243 = vmatpush.msra.mxu0 0.0
    %1244 = vmatpush.msra.mxu0 0.0
    %1245 = vmatpush.msra.mxu0 0.0
    %1246 = vmatpush.msra.mxu0 0.0
    %1247 = vmatpush.msra.mxu0 %v1218
    %1248 = vmatpush.msra.mxu0 %v1216
    %1249 = vmatpush.msra.mxu0 %v1214
    %1250 = vmatpush.msra.mxu0 %v1212
    %1251 = vmatpush.msra.mxu0 %v1210
    %1252 = vmatpush.msra.mxu0 %v1208
    %1253 = vmatpush.msra.mxu0 %v1206
    %1254 = vmatpush.msra.mxu0 %v1204
    %1255 = vmatmul.f32.gmra.mxu0 %v163
    %v1256 = vpop.f32.mrf.mxu0
    %v1257 = vadd.f32 0.0, %v1256
    %1258 = vdwg.mxu0
    %v1259 = vadd.f32 %v1175, %v1237
    %v1260 = vadd.f32 %v1198, %v1257
    %v1261 = vxor.u32 %v1259, 2147483648
    %v1262 = vxor.u32 %v1260, 2147483648
    %v1263 = vmul.f32 %v1261, 1.442695
    %v1264 = vpow.pop %v1263
    %v1265 = vmul.f32 %v1262, 1.442695
    %v1266 = vpow.pop %v1265
    %v1267 = vadd.f32 %v1264, 1.0
    %v1268 = vadd.f32 %v1266, 1.0
    %v1269 = vrcp.pop %v1267
    %v1270 = vmul.f32 %v1267, %v1269
    %v1271 = vsub.f32 1.0, %v1270
    %v1272 = vmul.f32 %v1269, %v1271
    %v1273 = vadd.f32 %v1269, %v1272
    %vm1274 = vweird.f32 %v1267
    %vm1275 = vweird.f32 %v1269
    %vm1276 = vmor %vm1274, %vm1275
    %v1277 = vsel %vm1276, %v1269, %v1273
    %v1278 = vand.u32 2147483647, %v1267
    %vm1279 = vcmp.eq.f32.partialorder %v1278, 8.507059e+37
    %v1280 = vand.u32 %v1267, 2147483648
    %v1281 = vor.u32 1.1754944e-38, %v1280
    %v1282 = vsel %vm1279, %v1281, %v1277
    %v1283 = vmul.f32 1.0, %v1282
    %v1284 = vrcp.pop %v1268
    %v1285 = vmul.f32 %v1268, %v1284
    %v1286 = vsub.f32 1.0, %v1285
    %v1287 = vmul.f32 %v1284, %v1286
    %v1288 = vadd.f32 %v1284, %v1287
    %vm1289 = vweird.f32 %v1268
    %vm1290 = vweird.f32 %v1284
    %vm1291 = vmor %vm1289, %vm1290
    %v1292 = vsel %vm1291, %v1284, %v1288
    %v1293 = vand.u32 2147483647, %v1268
    %vm1294 = vcmp.eq.f32.partialorder %v1293, 8.507059e+37
    %v1295 = vand.u32 %v1268, 2147483648
    %v1296 = vor.u32 1.1754944e-38, %v1295
    %v1297 = vsel %vm1294, %v1296, %v1292
    %v1298 = vmul.f32 1.0, %v1297
    %v1299 = vtanh.pop %v1260
    %v1300 = vmul.f32 %v1283, 0.0
    %v1301 = vmul.f32 %v1283, %v1299
    %1303 = vrot.lane.b32.xlu0 %v1301, 64
    %v1304 = vpop.permute.xlu0 %1303
    %v1306 = vadd.f32 %v1300, %v1304
    %v1307 = vtanh.pop %v1306
    %v1308 = vmul.f32 %v1298, %v1307
    %1310 = vrot.lane.b32.xlu0 %v1308, 64
    %v1311 = vpop.permute.xlu0 %1310
    %v1312 = vsel %vm161, %v1311, 0
    %1314 = vmatpush.msra.mxu0 0.0
    %1315 = vmatpush.msra.mxu0 0.0
    %1316 = vmatpush.msra.mxu0 0.0
    %1317 = vmatpush.msra.mxu0 0.0
    %1318 = vmatpush.msra.mxu0 0.0
    %1319 = vmatpush.msra.mxu0 0.0
    %1320 = vmatpush.msra.mxu0 0.0
    %1321 = vmatpush.msra.mxu0 0.0
    %1322 = vmatpush.msra.mxu0 %v1217
    %1323 = vmatpush.msra.mxu0 %v1215
    %1324 = vmatpush.msra.mxu0 %v1213
    %1325 = vmatpush.msra.mxu0 %v1211
    %1326 = vmatpush.msra.mxu0 %v1209
    %1327 = vmatpush.msra.mxu0 %v1207
    %1328 = vmatpush.msra.mxu0 %v1205
    %1329 = vmatpush.msra.mxu0 %v1203
    %1330 = vmatmul.f32.gmra.mxu0 %v1312
    %v1331 = vpop.f32.mrf.mxu0
    %v1332 = vadd.f32 0.0, %v1331
    %1333 = vdwg.mxu0
    %1334 = vmatpush.msra.mxu0 0.0
    %1335 = vmatpush.msra.mxu0 0.0
    %1336 = vmatpush.msra.mxu0 0.0
    %1337 = vmatpush.msra.mxu0 0.0
    %1338 = vmatpush.msra.mxu0 0.0
    %1339 = vmatpush.msra.mxu0 0.0
    %1340 = vmatpush.msra.mxu0 0.0
    %1341 = vmatpush.msra.mxu0 0.0
    %1342 = vmatpush.msra.mxu0 %v1218
    %1343 = vmatpush.msra.mxu0 %v1216
    %1344 = vmatpush.msra.mxu0 %v1214
    %1345 = vmatpush.msra.mxu0 %v1212
    %1346 = vmatpush.msra.mxu0 %v1210
    %1347 = vmatpush.msra.mxu0 %v1208
    %1348 = vmatpush.msra.mxu0 %v1206
    %1349 = vmatpush.msra.mxu0 %v1204
    %1350 = vmatmul.f32.gmra.mxu0 %v1312
    %v1351 = vpop.f32.mrf.mxu0
    %v1352 = vadd.f32 0.0, %v1351
    %1353 = vdwg.mxu0
    %v1356 = vrot.slane %v1332, 6
    %v1357 = vrot.slane %v1352, 6
    %v1360 = vadd.f32 %v1175, %v1356
    %v1361 = vadd.f32 %v1198, %v1357
    %v1362 = vxor.u32 %v1360, 2147483648
    %v1363 = vxor.u32 %v1361, 2147483648
    %v1364 = vmul.f32 %v1362, 1.442695
    %v1365 = vpow.pop %v1364
    %v1366 = vmul.f32 %v1363, 1.442695
    %v1367 = vpow.pop %v1366
    %v1368 = vadd.f32 %v1365, 1.0
    %v1369 = vadd.f32 %v1367, 1.0
    %v1370 = vrcp.pop %v1368
    %v1371 = vmul.f32 %v1368, %v1370
    %v1372 = vsub.f32 1.0, %v1371
    %v1373 = vmul.f32 %v1370, %v1372
    %v1374 = vadd.f32 %v1370, %v1373
    %vm1375 = vweird.f32 %v1368
    %vm1376 = vweird.f32 %v1370
    %vm1377 = vmor %vm1375, %vm1376
    %v1378 = vsel %vm1377, %v1370, %v1374
    %v1379 = vand.u32 2147483647, %v1368
    %vm1380 = vcmp.eq.f32.partialorder %v1379, 8.507059e+37
    %v1381 = vand.u32 %v1368, 2147483648
    %v1382 = vor.u32 1.1754944e-38, %v1381
    %v1383 = vsel %vm1380, %v1382, %v1378
    %v1384 = vmul.f32 1.0, %v1383
    %v1385 = vrcp.pop %v1369
    %v1386 = vmul.f32 %v1369, %v1385
    %v1387 = vsub.f32 1.0, %v1386
    %v1388 = vmul.f32 %v1385, %v1387
    %v1389 = vadd.f32 %v1385, %v1388
    %vm1390 = vweird.f32 %v1369
    %vm1391 = vweird.f32 %v1385
    %vm1392 = vmor %vm1390, %vm1391
    %v1393 = vsel %vm1392, %v1385, %v1389
    %v1394 = vand.u32 2147483647, %v1369
    %vm1395 = vcmp.eq.f32.partialorder %v1394, 8.507059e+37
    %v1396 = vand.u32 %v1369, 2147483648
    %v1397 = vor.u32 1.1754944e-38, %v1396
    %v1398 = vsel %vm1395, %v1397, %v1393
    %v1399 = vmul.f32 1.0, %v1398
    %v1400 = vtanh.pop %v1361
    %v1402 = vrot.slane %v1306, 6
    %v1404 = vmul.f32 %v1384, %v1402
    %v1405 = vmul.f32 %v1384, %v1400
    %1407 = vrot.lane.b32.xlu0 %v1405, 64
    %v1408 = vpop.permute.xlu0 %1407
    %v1410 = vadd.f32 %v1404, %v1408
    %v1411 = vtanh.pop %v1410
    %v1412 = vmul.f32 %v1399, %v1411
    %v1414 = vrot.slane %v1412, 2
    %1415 = vrot.lane.b32.xlu0 %v1414, 64
    %v1416 = vpop.permute.xlu0 %1415
    %v1417 = vsel %vm161, %v1416, 0
    %1419 = vmatpush.msra.mxu0 0.0
    %1420 = vmatpush.msra.mxu0 0.0
    %1421 = vmatpush.msra.mxu0 0.0
    %1422 = vmatpush.msra.mxu0 0.0
    %1423 = vmatpush.msra.mxu0 0.0
    %1424 = vmatpush.msra.mxu0 0.0
    %1425 = vmatpush.msra.mxu0 0.0
    %1426 = vmatpush.msra.mxu0 0.0
    %1427 = vmatpush.msra.mxu0 %v1217
    %1428 = vmatpush.msra.mxu0 %v1215
    %1429 = vmatpush.msra.mxu0 %v1213
    %1430 = vmatpush.msra.mxu0 %v1211
    %1431 = vmatpush.msra.mxu0 %v1209
    %1432 = vmatpush.msra.mxu0 %v1207
    %1433 = vmatpush.msra.mxu0 %v1205
    %1434 = vmatpush.msra.mxu0 %v1203
    %1435 = vmatmul.f32.gmra.mxu0 %v1417
    %v1436 = vpop.f32.mrf.mxu0
    %v1437 = vadd.f32 0.0, %v1436
    %1438 = vdwg.mxu0
    %1439 = vmatpush.msra.mxu0 0.0
    %1440 = vmatpush.msra.mxu0 0.0
    %1441 = vmatpush.msra.mxu0 0.0
    %1442 = vmatpush.msra.mxu0 0.0
    %1443 = vmatpush.msra.mxu0 0.0
    %1444 = vmatpush.msra.mxu0 0.0
    %1445 = vmatpush.msra.mxu0 0.0
    %1446 = vmatpush.msra.mxu0 0.0
    %1447 = vmatpush.msra.mxu0 %v1218
    %1448 = vmatpush.msra.mxu0 %v1216
    %1449 = vmatpush.msra.mxu0 %v1214
    %1450 = vmatpush.msra.mxu0 %v1212
    %1451 = vmatpush.msra.mxu0 %v1210
    %1452 = vmatpush.msra.mxu0 %v1208
    %1453 = vmatpush.msra.mxu0 %v1206
    %1454 = vmatpush.msra.mxu0 %v1204
    %1455 = vmatmul.f32.gmra.mxu0 %v1417
    %v1456 = vpop.f32.mrf.mxu0
    %v1457 = vadd.f32 0.0, %v1456
    %1458 = vdwg.mxu0
    %v1461 = vrot.slane %v1437, 4
    %v1462 = vrot.slane %v1457, 4
    %v1465 = vadd.f32 %v1175, %v1461
    %v1466 = vadd.f32 %v1198, %v1462
    %v1467 = vxor.u32 %v1465, 2147483648
    %v1468 = vxor.u32 %v1466, 2147483648
    %v1469 = vmul.f32 %v1467, 1.442695
    %v1470 = vpow.pop %v1469
    %v1471 = vmul.f32 %v1468, 1.442695
    %v1472 = vpow.pop %v1471
    %v1473 = vadd.f32 %v1470, 1.0
    %v1474 = vadd.f32 %v1472, 1.0
    %v1475 = vrcp.pop %v1473
    %v1476 = vmul.f32 %v1473, %v1475
    %v1477 = vsub.f32 1.0, %v1476
    %v1478 = vmul.f32 %v1475, %v1477
    %v1479 = vadd.f32 %v1475, %v1478
    %vm1480 = vweird.f32 %v1473
    %vm1481 = vweird.f32 %v1475
    %vm1482 = vmor %vm1480, %vm1481
    %v1483 = vsel %vm1482, %v1475, %v1479
    %v1484 = vand.u32 2147483647, %v1473
    %vm1485 = vcmp.eq.f32.partialorder %v1484, 8.507059e+37
    %v1486 = vand.u32 %v1473, 2147483648
    %v1487 = vor.u32 1.1754944e-38, %v1486
    %v1488 = vsel %vm1485, %v1487, %v1483
    %v1489 = vmul.f32 1.0, %v1488
    %v1490 = vrcp.pop %v1474
    %v1491 = vmul.f32 %v1474, %v1490
    %v1492 = vsub.f32 1.0, %v1491
    %v1493 = vmul.f32 %v1490, %v1492
    %v1494 = vadd.f32 %v1490, %v1493
    %vm1495 = vweird.f32 %v1474
    %vm1496 = vweird.f32 %v1490
    %vm1497 = vmor %vm1495, %vm1496
    %v1498 = vsel %vm1497, %v1490, %v1494
    %v1499 = vand.u32 2147483647, %v1474
    %vm1500 = vcmp.eq.f32.partialorder %v1499, 8.507059e+37
    %v1501 = vand.u32 %v1474, 2147483648
    %v1502 = vor.u32 1.1754944e-38, %v1501
    %v1503 = vsel %vm1500, %v1502, %v1498
    %v1504 = vmul.f32 1.0, %v1503
    %v1505 = vtanh.pop %v1466
    %v1507 = vrot.slane %v1410, 6
    %v1509 = vmul.f32 %v1489, %v1507
    %v1510 = vmul.f32 %v1489, %v1505
    %1512 = vrot.lane.b32.xlu0 %v1510, 64
    %v1513 = vpop.permute.xlu0 %1512
    %v1515 = vadd.f32 %v1509, %v1513
    %v1516 = vtanh.pop %v1515
    %v1517 = vmul.f32 %v1504, %v1516
    %v1519 = vrot.slane %v1517, 4
    %1520 = vrot.lane.b32.xlu0 %v1519, 64
    %v1521 = vpop.permute.xlu0 %1520
    %v1522 = vsel %vm161, %v1521, 0
    %1524 = vmatpush.msra.mxu0 0.0
    %1525 = vmatpush.msra.mxu0 0.0
    %1526 = vmatpush.msra.mxu0 0.0
    %1527 = vmatpush.msra.mxu0 0.0
    %1528 = vmatpush.msra.mxu0 0.0
    %1529 = vmatpush.msra.mxu0 0.0
    %1530 = vmatpush.msra.mxu0 0.0
    %1531 = vmatpush.msra.mxu0 0.0
    %1532 = vmatpush.msra.mxu0 %v1217
    %1533 = vmatpush.msra.mxu0 %v1215
    %1534 = vmatpush.msra.mxu0 %v1213
    %1535 = vmatpush.msra.mxu0 %v1211
    %1536 = vmatpush.msra.mxu0 %v1209
    %1537 = vmatpush.msra.mxu0 %v1207
    %1538 = vmatpush.msra.mxu0 %v1205
    %1539 = vmatpush.msra.mxu0 %v1203
    %1540 = vmatmul.f32.gmra.mxu0 %v1522
    %v1541 = vpop.f32.mrf.mxu0
    %v1542 = vadd.f32 0.0, %v1541
    %1543 = vdwg.mxu0
    %1544 = vmatpush.msra.mxu0 0.0
    %1545 = vmatpush.msra.mxu0 0.0
    %1546 = vmatpush.msra.mxu0 0.0
    %1547 = vmatpush.msra.mxu0 0.0
    %1548 = vmatpush.msra.mxu0 0.0
    %1549 = vmatpush.msra.mxu0 0.0
    %1550 = vmatpush.msra.mxu0 0.0
    %1551 = vmatpush.msra.mxu0 0.0
    %1552 = vmatpush.msra.mxu0 %v1218
    %1553 = vmatpush.msra.mxu0 %v1216
    %1554 = vmatpush.msra.mxu0 %v1214
    %1555 = vmatpush.msra.mxu0 %v1212
    %1556 = vmatpush.msra.mxu0 %v1210
    %1557 = vmatpush.msra.mxu0 %v1208
    %1558 = vmatpush.msra.mxu0 %v1206
    %1559 = vmatpush.msra.mxu0 %v1204
    %1560 = vmatmul.f32.gmra.mxu0 %v1522
    %v1561 = vpop.f32.mrf.mxu0
    %v1562 = vadd.f32 0.0, %v1561
    %1563 = vdwg.mxu0
    %v1566 = vrot.slane %v1542, 2
    %v1567 = vrot.slane %v1562, 2
    %v1570 = vadd.f32 %v1175, %v1566
    %v1571 = vadd.f32 %v1198, %v1567
    %v1572 = vxor.u32 %v1570, 2147483648
    %v1573 = vxor.u32 %v1571, 2147483648
    %v1574 = vmul.f32 %v1572, 1.442695
    %v1575 = vpow.pop %v1574
    %v1576 = vmul.f32 %v1573, 1.442695
    %v1577 = vpow.pop %v1576
    %v1578 = vadd.f32 %v1575, 1.0
    %v1579 = vadd.f32 %v1577, 1.0
    %v1580 = vrcp.pop %v1578
    %v1581 = vmul.f32 %v1578, %v1580
    %v1582 = vsub.f32 1.0, %v1581
    %v1583 = vmul.f32 %v1580, %v1582
    %v1584 = vadd.f32 %v1580, %v1583
    %vm1585 = vweird.f32 %v1578
    %vm1586 = vweird.f32 %v1580
    %vm1587 = vmor %vm1585, %vm1586
    %v1588 = vsel %vm1587, %v1580, %v1584
    %v1589 = vand.u32 2147483647, %v1578
    %vm1590 = vcmp.eq.f32.partialorder %v1589, 8.507059e+37
    %v1591 = vand.u32 %v1578, 2147483648
    %v1592 = vor.u32 1.1754944e-38, %v1591
    %v1593 = vsel %vm1590, %v1592, %v1588
    %v1594 = vmul.f32 1.0, %v1593
    %v1595 = vrcp.pop %v1579
    %v1596 = vmul.f32 %v1579, %v1595
    %v1597 = vsub.f32 1.0, %v1596
    %v1598 = vmul.f32 %v1595, %v1597
    %v1599 = vadd.f32 %v1595, %v1598
    %vm1600 = vweird.f32 %v1579
    %vm1601 = vweird.f32 %v1595
    %vm1602 = vmor %vm1600, %vm1601
    %v1603 = vsel %vm1602, %v1595, %v1599
    %v1604 = vand.u32 2147483647, %v1579
    %vm1605 = vcmp.eq.f32.partialorder %v1604, 8.507059e+37
    %v1606 = vand.u32 %v1579, 2147483648
    %v1607 = vor.u32 1.1754944e-38, %v1606
    %v1608 = vsel %vm1605, %v1607, %v1603
    %v1609 = vmul.f32 1.0, %v1608
    %v1610 = vtanh.pop %v1571
    %v1612 = vrot.slane %v1515, 6
    %v1614 = vmul.f32 %v1594, %v1612
    %v1615 = vmul.f32 %v1594, %v1610
    %1617 = vrot.lane.b32.xlu0 %v1615, 64
    %v1618 = vpop.permute.xlu0 %1617
    %v1620 = vadd.f32 %v1614, %v1618
    %v1621 = vtanh.pop %v1620
    %v1622 = vmul.f32 %v1609, %v1621
    %v1624 = vrot.slane %v1622, 6
    %1625 = vrot.lane.b32.xlu0 %v1624, 64
    %v1626 = vpop.permute.xlu0 %1625
    %v1627 = vsel %vm161, %v1626, 0
    %1629 = vmatpush.msra.mxu0 0.0
    %1630 = vmatpush.msra.mxu0 0.0
    %1631 = vmatpush.msra.mxu0 0.0
    %1632 = vmatpush.msra.mxu0 0.0
    %1633 = vmatpush.msra.mxu0 0.0
    %1634 = vmatpush.msra.mxu0 0.0
    %1635 = vmatpush.msra.mxu0 0.0
    %1636 = vmatpush.msra.mxu0 0.0
    %1637 = vmatpush.msra.mxu0 %v1217
    %1638 = vmatpush.msra.mxu0 %v1215
    %1639 = vmatpush.msra.mxu0 %v1213
    %1640 = vmatpush.msra.mxu0 %v1211
    %1641 = vmatpush.msra.mxu0 %v1209
    %1642 = vmatpush.msra.mxu0 %v1207
    %1643 = vmatpush.msra.mxu0 %v1205
    %1644 = vmatpush.msra.mxu0 %v1203
    %1645 = vmatmul.f32.gmra.mxu0 %v1627
    %v1646 = vpop.f32.mrf.mxu0
    %v1647 = vadd.f32 0.0, %v1646
    %1648 = vdwg.mxu0
    %1649 = vmatpush.msra.mxu0 0.0
    %1650 = vmatpush.msra.mxu0 0.0
    %1651 = vmatpush.msra.mxu0 0.0
    %1652 = vmatpush.msra.mxu0 0.0
    %1653 = vmatpush.msra.mxu0 0.0
    %1654 = vmatpush.msra.mxu0 0.0
    %1655 = vmatpush.msra.mxu0 0.0
    %1656 = vmatpush.msra.mxu0 0.0
    %1657 = vmatpush.msra.mxu0 %v1218
    %1658 = vmatpush.msra.mxu0 %v1216
    %1659 = vmatpush.msra.mxu0 %v1214
    %1660 = vmatpush.msra.mxu0 %v1212
    %1661 = vmatpush.msra.mxu0 %v1210
    %1662 = vmatpush.msra.mxu0 %v1208
    %1663 = vmatpush.msra.mxu0 %v1206
    %1664 = vmatpush.msra.mxu0 %v1204
    %1665 = vmatmul.f32.gmra.mxu0 %v1627
    %v1666 = vpop.f32.mrf.mxu0
    %v1667 = vadd.f32 0.0, %v1666
    %1668 = vdwg.mxu0
    %v1669 = vadd.f32 %v1178, %v1647
    %v1670 = vadd.f32 %v1201, %v1667
    %v1671 = vxor.u32 %v1669, 2147483648
    %v1672 = vxor.u32 %v1670, 2147483648
    %v1673 = vmul.f32 %v1671, 1.442695
    %v1674 = vpow.pop %v1673
    %v1675 = vmul.f32 %v1672, 1.442695
    %v1676 = vpow.pop %v1675
    %v1677 = vadd.f32 %v1674, 1.0
    %v1678 = vadd.f32 %v1676, 1.0
    %v1679 = vrcp.pop %v1677
    %v1680 = vmul.f32 %v1677, %v1679
    %v1681 = vsub.f32 1.0, %v1680
    %v1682 = vmul.f32 %v1679, %v1681
    %v1683 = vadd.f32 %v1679, %v1682
    %vm1684 = vweird.f32 %v1677
    %vm1685 = vweird.f32 %v1679
    %vm1686 = vmor %vm1684, %vm1685
    %v1687 = vsel %vm1686, %v1679, %v1683
    %v1688 = vand.u32 2147483647, %v1677
    %vm1689 = vcmp.eq.f32.partialorder %v1688, 8.507059e+37
    %v1690 = vand.u32 %v1677, 2147483648
    %v1691 = vor.u32 1.1754944e-38, %v1690
    %v1692 = vsel %vm1689, %v1691, %v1687
    %v1693 = vmul.f32 1.0, %v1692
    %v1694 = vrcp.pop %v1678
    %v1695 = vmul.f32 %v1678, %v1694
    %v1696 = vsub.f32 1.0, %v1695
    %v1697 = vmul.f32 %v1694, %v1696
    %v1698 = vadd.f32 %v1694, %v1697
    %vm1699 = vweird.f32 %v1678
    %vm1700 = vweird.f32 %v1694
    %vm1701 = vmor %vm1699, %vm1700
    %v1702 = vsel %vm1701, %v1694, %v1698
    %v1703 = vand.u32 2147483647, %v1678
    %vm1704 = vcmp.eq.f32.partialorder %v1703, 8.507059e+37
    %v1705 = vand.u32 %v1678, 2147483648
    %v1706 = vor.u32 1.1754944e-38, %v1705
    %v1707 = vsel %vm1704, %v1706, %v1702
    %v1708 = vmul.f32 1.0, %v1707
    %v1709 = vtanh.pop %v1670
    %v1711 = vrot.slane %v1620, 6
    %v1713 = vmul.f32 %v1693, %v1711
    %v1714 = vmul.f32 %v1693, %v1709
    %1716 = vrot.lane.b32.xlu0 %v1714, 64
    %v1717 = vpop.permute.xlu0 %1716
    %v1719 = vadd.f32 %v1713, %v1717
    %v1720 = vtanh.pop %v1719
    %v1721 = vmul.f32 %v1708, %v1720
    %1723 = vrot.lane.b32.xlu0 %v1721, 64
    %v1724 = vpop.permute.xlu0 %1723
    %v1725 = vsel %vm161, %v1724, 0
    %1727 = vmatpush.msra.mxu0 0.0
    %1728 = vmatpush.msra.mxu0 0.0
    %1729 = vmatpush.msra.mxu0 0.0
    %1730 = vmatpush.msra.mxu0 0.0
    %1731 = vmatpush.msra.mxu0 0.0
    %1732 = vmatpush.msra.mxu0 0.0
    %1733 = vmatpush.msra.mxu0 0.0
    %1734 = vmatpush.msra.mxu0 0.0
    %1735 = vmatpush.msra.mxu0 %v1217
    %1736 = vmatpush.msra.mxu0 %v1215
    %1737 = vmatpush.msra.mxu0 %v1213
    %1738 = vmatpush.msra.mxu0 %v1211
    %1739 = vmatpush.msra.mxu0 %v1209
    %1740 = vmatpush.msra.mxu0 %v1207
    %1741 = vmatpush.msra.mxu0 %v1205
    %1742 = vmatpush.msra.mxu0 %v1203
    %1743 = vmatmul.f32.gmra.mxu0 %v1725
    %v1744 = vpop.f32.mrf.mxu0
    %v1745 = vadd.f32 0.0, %v1744
    %1746 = vdwg.mxu0
    %1747 = vmatpush.msra.mxu0 0.0
    %1748 = vmatpush.msra.mxu0 0.0
    %1749 = vmatpush.msra.mxu0 0.0
    %1750 = vmatpush.msra.mxu0 0.0
    %1751 = vmatpush.msra.mxu0 0.0
    %1752 = vmatpush.msra.mxu0 0.0
    %1753 = vmatpush.msra.mxu0 0.0
    %1754 = vmatpush.msra.mxu0 0.0
    %1755 = vmatpush.msra.mxu0 %v1218
    %1756 = vmatpush.msra.mxu0 %v1216
    %1757 = vmatpush.msra.mxu0 %v1214
    %1758 = vmatpush.msra.mxu0 %v1212
    %1759 = vmatpush.msra.mxu0 %v1210
    %1760 = vmatpush.msra.mxu0 %v1208
    %1761 = vmatpush.msra.mxu0 %v1206
    %1762 = vmatpush.msra.mxu0 %v1204
    %1763 = vmatmul.f32.gmra.mxu0 %v1725
    %v1764 = vpop.f32.mrf.mxu0
    %v1765 = vadd.f32 0.0, %v1764
    %1766 = vdwg.mxu0
    %v1769 = vrot.slane %v1745, 6
    %v1770 = vrot.slane %v1765, 6
    %v1773 = vadd.f32 %v1178, %v1769
    %v1774 = vadd.f32 %v1201, %v1770
    %v1775 = vxor.u32 %v1773, 2147483648
    %v1776 = vxor.u32 %v1774, 2147483648
    %v1777 = vmul.f32 %v1775, 1.442695
    %v1778 = vpow.pop %v1777
    %v1779 = vmul.f32 %v1776, 1.442695
    %v1780 = vpow.pop %v1779
    %v1781 = vadd.f32 %v1778, 1.0
    %v1782 = vadd.f32 %v1780, 1.0
    %v1783 = vrcp.pop %v1781
    %v1784 = vmul.f32 %v1781, %v1783
    %v1785 = vsub.f32 1.0, %v1784
    %v1786 = vmul.f32 %v1783, %v1785
    %v1787 = vadd.f32 %v1783, %v1786
    %vm1788 = vweird.f32 %v1781
    %vm1789 = vweird.f32 %v1783
    %vm1790 = vmor %vm1788, %vm1789
    %v1791 = vsel %vm1790, %v1783, %v1787
    %v1792 = vand.u32 2147483647, %v1781
    %vm1793 = vcmp.eq.f32.partialorder %v1792, 8.507059e+37
    %v1794 = vand.u32 %v1781, 2147483648
    %v1795 = vor.u32 1.1754944e-38, %v1794
    %v1796 = vsel %vm1793, %v1795, %v1791
    %v1797 = vmul.f32 1.0, %v1796
    %v1798 = vrcp.pop %v1782
    %v1799 = vmul.f32 %v1782, %v1798
    %v1800 = vsub.f32 1.0, %v1799
    %v1801 = vmul.f32 %v1798, %v1800
    %v1802 = vadd.f32 %v1798, %v1801
    %vm1803 = vweird.f32 %v1782
    %vm1804 = vweird.f32 %v1798
    %vm1805 = vmor %vm1803, %vm1804
    %v1806 = vsel %vm1805, %v1798, %v1802
    %v1807 = vand.u32 2147483647, %v1782
    %vm1808 = vcmp.eq.f32.partialorder %v1807, 8.507059e+37
    %v1809 = vand.u32 %v1782, 2147483648
    %v1810 = vor.u32 1.1754944e-38, %v1809
    %v1811 = vsel %vm1808, %v1810, %v1806
    %v1812 = vmul.f32 1.0, %v1811
    %v1813 = vtanh.pop %v1774
    %v1815 = vrot.slane %v1719, 6
    %v1817 = vmul.f32 %v1797, %v1815
    %v1818 = vmul.f32 %v1797, %v1813
    %1820 = vrot.lane.b32.xlu0 %v1818, 64
    %v1821 = vpop.permute.xlu0 %1820
    %v1823 = vadd.f32 %v1817, %v1821
    %v1824 = vtanh.pop %v1823
    %v1825 = vmul.f32 %v1812, %v1824
    %v1827 = vrot.slane %v1825, 2
    %1828 = vrot.lane.b32.xlu0 %v1827, 64
    %v1829 = vpop.permute.xlu0 %1828
    %v1830 = vsel %vm161, %v1829, 0
    %1832 = vmatpush.msra.mxu0 0.0
    %1833 = vmatpush.msra.mxu0 0.0
    %1834 = vmatpush.msra.mxu0 0.0
    %1835 = vmatpush.msra.mxu0 0.0
    %1836 = vmatpush.msra.mxu0 0.0
    %1837 = vmatpush.msra.mxu0 0.0
    %1838 = vmatpush.msra.mxu0 0.0
    %1839 = vmatpush.msra.mxu0 0.0
    %1840 = vmatpush.msra.mxu0 %v1217
    %1841 = vmatpush.msra.mxu0 %v1215
    %1842 = vmatpush.msra.mxu0 %v1213
    %1843 = vmatpush.msra.mxu0 %v1211
    %1844 = vmatpush.msra.mxu0 %v1209
    %1845 = vmatpush.msra.mxu0 %v1207
    %1846 = vmatpush.msra.mxu0 %v1205
    %1847 = vmatpush.msra.mxu0 %v1203
    %1848 = vmatmul.f32.gmra.mxu0 %v1830
    %v1849 = vpop.f32.mrf.mxu0
    %v1850 = vadd.f32 0.0, %v1849
    %1851 = vdwg.mxu0
    %1852 = vmatpush.msra.mxu0 0.0
    %1853 = vmatpush.msra.mxu0 0.0
    %1854 = vmatpush.msra.mxu0 0.0
    %1855 = vmatpush.msra.mxu0 0.0
    %1856 = vmatpush.msra.mxu0 0.0
    %1857 = vmatpush.msra.mxu0 0.0
    %1858 = vmatpush.msra.mxu0 0.0
    %1859 = vmatpush.msra.mxu0 0.0
    %1860 = vmatpush.msra.mxu0 %v1218
    %1861 = vmatpush.msra.mxu0 %v1216
    %1862 = vmatpush.msra.mxu0 %v1214
    %1863 = vmatpush.msra.mxu0 %v1212
    %1864 = vmatpush.msra.mxu0 %v1210
    %1865 = vmatpush.msra.mxu0 %v1208
    %1866 = vmatpush.msra.mxu0 %v1206
    %1867 = vmatpush.msra.mxu0 %v1204
    %1868 = vmatmul.f32.gmra.mxu0 %v1830
    %v1869 = vpop.f32.mrf.mxu0
    %v1870 = vadd.f32 0.0, %v1869
    %1871 = vdwg.mxu0
    %v1874 = vrot.slane %v1850, 4
    %v1875 = vrot.slane %v1870, 4
    %v1878 = vadd.f32 %v1178, %v1874
    %v1879 = vadd.f32 %v1201, %v1875
    %v1880 = vxor.u32 %v1878, 2147483648
    %v1881 = vxor.u32 %v1879, 2147483648
    %v1882 = vmul.f32 %v1880, 1.442695
    %v1883 = vpow.pop %v1882
    %v1884 = vmul.f32 %v1881, 1.442695
    %v1885 = vpow.pop %v1884
    %v1886 = vadd.f32 %v1883, 1.0
    %v1887 = vadd.f32 %v1885, 1.0
    %v1888 = vrcp.pop %v1886
    %v1889 = vmul.f32 %v1886, %v1888
    %v1890 = vsub.f32 1.0, %v1889
    %v1891 = vmul.f32 %v1888, %v1890
    %v1892 = vadd.f32 %v1888, %v1891
    %vm1893 = vweird.f32 %v1886
    %vm1894 = vweird.f32 %v1888
    %vm1895 = vmor %vm1893, %vm1894
    %v1896 = vsel %vm1895, %v1888, %v1892
    %v1897 = vand.u32 2147483647, %v1886
    %vm1898 = vcmp.eq.f32.partialorder %v1897, 8.507059e+37
    %v1899 = vand.u32 %v1886, 2147483648
    %v1900 = vor.u32 1.1754944e-38, %v1899
    %v1901 = vsel %vm1898, %v1900, %v1896
    %v1902 = vmul.f32 1.0, %v1901
    %v1903 = vrcp.pop %v1887
    %v1904 = vmul.f32 %v1887, %v1903
    %v1905 = vsub.f32 1.0, %v1904
    %v1906 = vmul.f32 %v1903, %v1905
    %v1907 = vadd.f32 %v1903, %v1906
    %vm1908 = vweird.f32 %v1887
    %vm1909 = vweird.f32 %v1903
    %vm1910 = vmor %vm1908, %vm1909
    %v1911 = vsel %vm1910, %v1903, %v1907
    %v1912 = vand.u32 2147483647, %v1887
    %vm1913 = vcmp.eq.f32.partialorder %v1912, 8.507059e+37
    %v1914 = vand.u32 %v1887, 2147483648
    %v1915 = vor.u32 1.1754944e-38, %v1914
    %v1916 = vsel %vm1913, %v1915, %v1911
    %v1917 = vmul.f32 1.0, %v1916
    %v1918 = vtanh.pop %v1879
    %v1920 = vrot.slane %v1823, 6
    %v1922 = vmul.f32 %v1902, %v1920
    %v1923 = vmul.f32 %v1902, %v1918
    %1925 = vrot.lane.b32.xlu0 %v1923, 64
    %v1926 = vpop.permute.xlu0 %1925
    %v1928 = vadd.f32 %v1922, %v1926
    %v1929 = vtanh.pop %v1928
    %v1930 = vmul.f32 %v1917, %v1929
    %v1932 = vrot.slane %v1930, 4
    %1933 = vrot.lane.b32.xlu0 %v1932, 64
    %v1934 = vpop.permute.xlu0 %1933
    %v1935 = vsel %vm161, %v1934, 0
    %1937 = vmatpush.msra.mxu0 0.0
    %1938 = vmatpush.msra.mxu0 0.0
    %1939 = vmatpush.msra.mxu0 0.0
    %1940 = vmatpush.msra.mxu0 0.0
    %1941 = vmatpush.msra.mxu0 0.0
    %1942 = vmatpush.msra.mxu0 0.0
    %1943 = vmatpush.msra.mxu0 0.0
    %1944 = vmatpush.msra.mxu0 0.0
    %1945 = vmatpush.msra.mxu0 %v1217
    %1946 = vmatpush.msra.mxu0 %v1215
    %1947 = vmatpush.msra.mxu0 %v1213
    %1948 = vmatpush.msra.mxu0 %v1211
    %1949 = vmatpush.msra.mxu0 %v1209
    %1950 = vmatpush.msra.mxu0 %v1207
    %1951 = vmatpush.msra.mxu0 %v1205
    %1952 = vmatpush.msra.mxu0 %v1203
    %1953 = vmatmul.f32.gmra.mxu0 %v1935
    %v1954 = vpop.f32.mrf.mxu0
    %v1955 = vadd.f32 0.0, %v1954
    %1956 = vdwg.mxu0
    %1957 = vmatpush.msra.mxu0 0.0
    %1958 = vmatpush.msra.mxu0 0.0
    %1959 = vmatpush.msra.mxu0 0.0
    %1960 = vmatpush.msra.mxu0 0.0
    %1961 = vmatpush.msra.mxu0 0.0
    %1962 = vmatpush.msra.mxu0 0.0
    %1963 = vmatpush.msra.mxu0 0.0
    %1964 = vmatpush.msra.mxu0 0.0
    %1965 = vmatpush.msra.mxu0 %v1218
    %1966 = vmatpush.msra.mxu0 %v1216
    %1967 = vmatpush.msra.mxu0 %v1214
    %1968 = vmatpush.msra.mxu0 %v1212
    %1969 = vmatpush.msra.mxu0 %v1210
    %1970 = vmatpush.msra.mxu0 %v1208
    %1971 = vmatpush.msra.mxu0 %v1206
    %1972 = vmatpush.msra.mxu0 %v1204
    %1973 = vmatmul.f32.gmra.mxu0 %v1935
    %v1974 = vpop.f32.mrf.mxu0
    %v1975 = vadd.f32 0.0, %v1974
    %1976 = vdwg.mxu0
    %v1979 = vrot.slane %v1955, 2
    %v1980 = vrot.slane %v1975, 2
    %v1983 = vadd.f32 %v1178, %v1979
    %v1984 = vadd.f32 %v1201, %v1980
    %v1985 = vxor.u32 %v1983, 2147483648
    %v1986 = vxor.u32 %v1984, 2147483648
    %v1987 = vmul.f32 %v1985, 1.442695
    %v1988 = vpow.pop %v1987
    %v1989 = vmul.f32 %v1986, 1.442695
    %v1990 = vpow.pop %v1989
    %v1991 = vadd.f32 %v1988, 1.0
    %v1992 = vadd.f32 %v1990, 1.0
    %v1993 = vrcp.pop %v1991
    %v1994 = vmul.f32 %v1991, %v1993
    %v1995 = vsub.f32 1.0, %v1994
    %v1996 = vmul.f32 %v1993, %v1995
    %v1997 = vadd.f32 %v1993, %v1996
    %vm1998 = vweird.f32 %v1991
    %vm1999 = vweird.f32 %v1993
    %vm2000 = vmor %vm1998, %vm1999
    %v2001 = vsel %vm2000, %v1993, %v1997
    %v2002 = vand.u32 2147483647, %v1991
    %vm2003 = vcmp.eq.f32.partialorder %v2002, 8.507059e+37
    %v2004 = vand.u32 %v1991, 2147483648
    %v2005 = vor.u32 1.1754944e-38, %v2004
    %v2006 = vsel %vm2003, %v2005, %v2001
    %v2007 = vmul.f32 1.0, %v2006
    %v2008 = vrcp.pop %v1992
    %v2009 = vmul.f32 %v1992, %v2008
    %v2010 = vsub.f32 1.0, %v2009
    %v2011 = vmul.f32 %v2008, %v2010
    %v2012 = vadd.f32 %v2008, %v2011
    %vm2013 = vweird.f32 %v1992
    %vm2014 = vweird.f32 %v2008
    %vm2015 = vmor %vm2013, %vm2014
    %v2016 = vsel %vm2015, %v2008, %v2012
    %v2017 = vand.u32 2147483647, %v1992
    %vm2018 = vcmp.eq.f32.partialorder %v2017, 8.507059e+37
    %v2019 = vand.u32 %v1992, 2147483648
    %v2020 = vor.u32 1.1754944e-38, %v2019
    %v2021 = vsel %vm2018, %v2020, %v2016
    %v2022 = vmul.f32 1.0, %v2021
    %v2023 = vtanh.pop %v1984
    %v2025 = vrot.slane %v1928, 6
    %v2027 = vmul.f32 %v2007, %v2025
    %v2028 = vmul.f32 %v2007, %v2023
    %2030 = vrot.lane.b32.xlu0 %v2028, 64
    %v2031 = vpop.permute.xlu0 %2030
    %v2033 = vadd.f32 %v2027, %v2031
    %v2034 = vtanh.pop %v2033
    %v2035 = vmul.f32 %v2022, %v2034
    %v2036 = vld [vmem:[%s7] sm:$0xff]
    %v2037 = vld [vmem:[%s7 + $0x8] sm:$0xff]
    %v2038 = vld [vmem:[%s7 + $0x10] sm:$0xff]
    %v2039 = vld [vmem:[%s7 + $0x18] sm:$0xff]
    %v2040 = vld [vmem:[%s7 + $0x20] sm:$0xff]
    %v2041 = vld [vmem:[%s7 + $0x28] sm:$0xff]
    %v2042 = vld [vmem:[%s7 + $0x30] sm:$0xff]
    %v2043 = vld [vmem:[%s7 + $0x38] sm:$0xff]
    %v2044 = vld [vmem:[%s8] sm:$0x1]
    %v2046 = vperm.slane %v2044, 0
    %v2049 = vrot.slane %v2035, 6
    %2050 = vrot.lane.b32.xlu0 %v2049, 64
    %v2051 = vpop.permute.xlu0 %2050
    %v2052 = vsel %vm161, %v2051, 0
    %2054 = vmatpush.msra.mxu0 0.0
    %2055 = vmatpush.msra.mxu0 0.0
    %2056 = vmatpush.msra.mxu0 0.0
    %2057 = vmatpush.msra.mxu0 0.0
    %2058 = vmatpush.msra.mxu0 0.0
    %2059 = vmatpush.msra.mxu0 0.0
    %2060 = vmatpush.msra.mxu0 0.0
    %2061 = vmatpush.msra.mxu0 0.0
    %2062 = vmatpush.msra.mxu0 %v2043
    %2063 = vmatpush.msra.mxu0 %v2042
    %2064 = vmatpush.msra.mxu0 %v2041
    %2065 = vmatpush.msra.mxu0 %v2040
    %2066 = vmatpush.msra.mxu0 %v2039
    %2067 = vmatpush.msra.mxu0 %v2038
    %2068 = vmatpush.msra.mxu0 %v2037
    %2069 = vmatpush.msra.mxu0 %v2036
    %2070 = vmatmul.f32.gmra.mxu0 %v2052
    %v2071 = vpop.f32.mrf.mxu0
    %v2072 = vadd.f32 %v2046, %v2071
    %2073 = vdwg.mxu0
    %vm2074 = vcmask 58368
    %2075 = vst.msk [vmem:[#allocation9] sm:$0x3] %vm2074, %v2072
    // Predicated region
    $region50: #{tpu_custom_call.1} parent=1 // pred_check
      _
    $region51: #{tpu_custom_call.1} parent=1 // pred_check_branch
      %2077 = sbr.rel (0) target = $region53
    $region52: #{tpu_custom_call.1} parent=1 // pred_region
      %2079 = vsyncadd [#allocation5], 0
      %s2081 = sshll.u32 [#allocation9], 4
      %s2082 = int_to_ptr.vmem [resolvable:$true] %s2081
      %s2083 = sshll.u32 %s9, 4
      %s2084 = int_to_ptr.hbm [resolvable:$true] %s2083
      %2086 = dma.vmem_to_hbm [thread:$0]  %s2082, 32, %s2084, [#allocation5]
    $region53: #{tpu_custom_call.1} parent=1 // pred_fallthru
      _
    // Predicated region
    $region54: #{tpu_custom_call.1} parent=1 // pred_check
      _
    $region55: #{tpu_custom_call.1} parent=1 // pred_check_branch
      %2088 = sbr.rel (0) target = $region57
    $region56: #{tpu_custom_call.1} parent=1 // pred_region
      %2090 = dma.done [#allocation5], 32
    $region57: #{tpu_custom_call.1} parent=1 // pred_fallthru
      _
    %2091 = vsyncpa [#allocation4], 1
    %2092 = vsyncpa [#allocation7], 1
    %2093 = vsyncpa [#allocation5], 1

</llo_original>
